<compile_context>
chip_gen: v7x
topology: tpu7x:2x2x1
jax: 0.10.0
libtpu: 0.0.40
codegen_flags: <defaults>
</compile_context>

<pallas_src>
import jax
import jax.numpy as jnp
from jax.experimental import pallas as pl
from jax.experimental.pallas import tpu as pltpu


def _round_up(x, m):
    return ((x + m - 1) // m) * m


def _pad_last(a, mult=128):
    """Zero-pad the last dim of `a` up to a multiple of `mult`."""
    pad = (-a.shape[-1]) % mult
    if pad == 0:
        return a
    widths = [(0, 0)] * (a.ndim - 1) + [(0, pad)]
    return jnp.pad(a, widths)


def prep_params(params):
    """One-time weight prep (hoisted out of the forward path).

    Casts weights to bf16 for the MXU (half the weight DMA, 2x MXU rate on
    v6e/v7x) and lane-pads the output-facing weight/bias to a multiple of 128
    so the kernel writes a lane-dense output slab.  Biases stay f32 for the
    post-accumulation add (safe on v5e too, which has no bf16 VPU path).
    """
    w1, b1, w2, b2 = params
    e_real = w2.shape[1]
    w1b = w1.astype(jnp.bfloat16)                               # (D, H)
    b1f = b1.reshape(1, -1).astype(jnp.float32)                 # (1, H)
    w2b = _pad_last(w2).astype(jnp.bfloat16)                    # (H, E_pad)
    b2f = _pad_last(b2.reshape(1, -1)).astype(jnp.float32)      # (1, E_pad)
    return (w1b, b1f, w2b, b2f, e_real)


def _make_embed_kernel(n_branches):
    """Kernel: fused 2-layer MLP applied to n_branches row tiles per step."""

    def kernel(*refs):
        x_refs = refs[:n_branches]
        w1_ref, b1_ref, w2_ref, b2_ref = refs[n_branches:n_branches + 4]
        o_refs = refs[n_branches + 4:]

        # Load the resident weights once per step; reuse across branches.
        w1 = w1_ref[...]
        b1 = b1_ref[...]
        w2 = w2_ref[...]
        b2 = b2_ref[...]

        # One MXU pass per branch, writing straight to that branch's output
        # block (no VMEM concat temp).  Activations are cast to bf16 on the
        # VPU just before the dot; accumulation stays f32.
        for x_ref, o_ref in zip(x_refs, o_refs):
            x = x_ref[...].astype(jnp.bfloat16)                 # (tb, D)
            h = jnp.dot(x, w1, preferred_element_type=jnp.float32)
            h = jnp.maximum(h + b1, 0.0)                        # (tb, H) f32
            e = jnp.dot(h.astype(jnp.bfloat16), w2,
                        preferred_element_type=jnp.float32)     # (tb, E_pad)
            o_ref[...] = (e + b2).astype(o_ref.dtype)

    return kernel


def _embed_pallas(xs_flat, prepped, tb=None):
    """Run the fused embedding MLP on a list of flattened (B, D) inputs.

    Returns one (B, E) array per input branch.
    """
    w1b, b1f, w2b, b2f, e_real = prepped
    n = len(xs_flat)
    B, D = xs_flat[0].shape
    H = w1b.shape[1]
    E_pad = w2b.shape[1]

    # Row tile per branch: a multiple of 8 sublanes.  256 rows/branch/step by
    # default (so a triplet step feeds 3*256 MXU rows); small batches collapse
    # to a single aligned tile.
    if tb is None:
        tb = 256 if B >= 256 else _round_up(B, 8)
    tb = max(8, _round_up(tb, 8))
    B_pad = _round_up(B, tb)
    n_tiles = B_pad // tb

    if B_pad != B:
        pad_rows = [(0, B_pad - B), (0, 0)]
        xs_flat = [jnp.pad(x, pad_rows) for x in xs_flat]

    x_spec = pl.BlockSpec((tb, D), lambda i: (i, 0))
    out_spec = pl.BlockSpec((tb, E_pad), lambda i: (i, 0))
    # Weights/biases: constant block index (VMEM-resident across the grid),
    # single-buffered since the block never changes.
    w_specs = [
        pl.BlockSpec(w1b.shape, lambda i: (0, 0), pipeline_mode=pl.Buffered(1)),
        pl.BlockSpec(b1f.shape, lambda i: (0, 0), pipeline_mode=pl.Buffered(1)),
        pl.BlockSpec(w2b.shape, lambda i: (0, 0), pipeline_mode=pl.Buffered(1)),
        pl.BlockSpec(b2f.shape, lambda i: (0, 0), pipeline_mode=pl.Buffered(1)),
    ]

    # Explicit VMEM budget (v7x has only 64 MiB physical / 32 MiB scoped
    # default): double-buffered activation + output tiles, single-buffered
    # weights, plus in-kernel temporaries; 2x margin, clamped to 48 MiB.
    bytes_x = n * 2 * tb * D * 4
    bytes_o = n * 2 * tb * E_pad * 4
    bytes_w = (D * H + H * E_pad) * 2 + (H + E_pad) * 4
    bytes_tmp = tb * (D * 2 + H * 6 + E_pad * 4)
    est = bytes_x + bytes_o + bytes_w + bytes_tmp
    vmem_limit = int(min(max(2 * est, 16 * 2**20), 48 * 2**20))

    outs = pl.pallas_call(
        _make_embed_kernel(n),
        out_shape=tuple(
            jax.ShapeDtypeStruct((B_pad, E_pad), jnp.float32) for _ in range(n)
        ),
        grid_spec=pltpu.PrefetchScalarGridSpec(
            num_scalar_prefetch=0,
            grid=(n_tiles,),
            in_specs=[x_spec] * n + w_specs,
            out_specs=[out_spec] * n,
        ),
        compiler_params=pltpu.CompilerParams(
            dimension_semantics=("parallel",),   # row tiles split across TCs (v7x)
            vmem_limit_bytes=vmem_limit,
        ),
    )(*xs_flat, w1b, b1f, w2b, b2f)

    # One fused slice per branch drops row padding and lane padding together.
    if B_pad != B or E_pad != e_real:
        outs = tuple(o[:B, :e_real] for o in outs)
    return tuple(outs)


def triplet_net_forward(x1, x2, x3, prepped):
    """Pallas implementation of TripletNet.forward(x1, x2, x3)."""
    B = x1.shape[0]
    D = prepped[0].shape[0]
    # Flatten NCHW -> (B, D) (same row-major order as torch.flatten).  Each
    # branch enters the kernel as its own input: no stacked HBM copy.
    xs = [x1.reshape(B, D), x2.reshape(B, D), x3.reshape(B, D)]
    o1, o2, o3 = _embed_pallas(xs, prepped)
    return o1, o2, o3


def get_embedding(x, prepped):
    """Pallas implementation of TripletNet.get_embedding(x) (single branch)."""
    B = x.shape[0]
    D = prepped[0].shape[0]
    (out,) = _embed_pallas([x.reshape(B, D)], prepped)
    return out


def init_embedding_params(key, d_in, d_hidden, d_embed):
    k1, k2, k3, k4 = jax.random.split(key, 4)
    w1 = jax.random.normal(k1, (d_in, d_hidden), jnp.float32) * 0.02
    b1 = jax.random.normal(k2, (1, d_hidden), jnp.float32) * 0.01
    w2 = jax.random.normal(k3, (d_hidden, d_embed), jnp.float32) * 0.02
    b2 = jax.random.normal(k4, (1, d_embed), jnp.float32) * 0.01
    return w1, b1, w2, b2


if __name__ == "__main__":
    B, C, H, W = 2, 4, 16, 16          # small NCHW inputs
    D = C * H * W                      # 1024 flattened features
    HID, EMB = 128, 64                 # embedding net sizes

    key = jax.random.PRNGKey(0)
    kx1, kx2, kx3, kp = jax.random.split(key, 4)
    x1 = jax.random.normal(kx1, (B, C, H, W), jnp.float32)
    x2 = jax.random.normal(kx2, (B, C, H, W), jnp.float32)
    x3 = jax.random.normal(kx3, (B, C, H, W), jnp.float32)
    params = init_embedding_params(kp, D, HID, EMB)

    # Weight prep (bf16 cast + lane pad) done ONCE, reused by every forward.
    prepped = prep_params(params)

    out1, out2, out3 = triplet_net_forward(x1, x2, x3, prepped)
    emb1 = get_embedding(x1, prepped)
    jax.block_until_ready((out1, out2, out3, emb1))

    # Pure-JAX f32 reference.  The kernel uses bf16 weights/activations on the
    # MXU with f32 accumulation, so tolerances are relaxed accordingly.
    def ref_embed(x):
        w1, b1, w2, b2 = params
        h = jnp.maximum(x.reshape(x.shape[0], -1) @ w1 + b1, 0.0)
        return h @ w2 + b2

    r1, r2, r3 = ref_embed(x1), ref_embed(x2), ref_embed(x3)
    assert out1.shape == (B, EMB) and out2.shape == (B, EMB) and out3.shape == (B, EMB)
    assert jnp.allclose(out1, r1, atol=2e-2, rtol=2e-2)
    assert jnp.allclose(out2, r2, atol=2e-2, rtol=2e-2)
    assert jnp.allclose(out3, r3, atol=2e-2, rtol=2e-2)
    assert emb1.shape == (B, EMB)
    assert jnp.allclose(emb1, out1, atol=1e-5, rtol=1e-5)

    print("KERNEL_OK")
</pallas_src>

<mosaic_0001>
module attributes {stable_mosaic.version = 11 : i64} {
  func.func @kernel(%arg0: i32, %arg1: memref<8x1024xf32, #tpu.memory_space<vmem>>, %arg2: memref<8x1024xf32, #tpu.memory_space<vmem>>, %arg3: memref<8x1024xf32, #tpu.memory_space<vmem>>, %arg4: memref<1024x128xbf16, #tpu.memory_space<vmem>>, %arg5: memref<1x128xf32, #tpu.memory_space<vmem>>, %arg6: memref<128x128xbf16, #tpu.memory_space<vmem>>, %arg7: memref<1x128xf32, #tpu.memory_space<vmem>>, %arg8: memref<8x128xf32, #tpu.memory_space<vmem>>, %arg9: memref<8x128xf32, #tpu.memory_space<vmem>>, %arg10: memref<8x128xf32, #tpu.memory_space<vmem>>) attributes {dimension_semantics = [#tpu.dimension_semantics<parallel>], iteration_bounds = array<i64: 1>, scalar_prefetch = 0 : i64, scratch_operands = 0 : i64, tpu.core_type = #tpu.core_type<tc>, window_params = [{transform_indices = @transform_0, window_bounds = array<i64: 8, 1024>}, {transform_indices = @transform_1, window_bounds = array<i64: 8, 1024>}, {transform_indices = @transform_2, window_bounds = array<i64: 8, 1024>}, {pipeline_mode = #tpu.pipeline_mode<synchronous>, transform_indices = @transform_3, window_bounds = array<i64: 1024, 128>}, {pipeline_mode = #tpu.pipeline_mode<synchronous>, transform_indices = @transform_4, window_bounds = array<i64: 1, 128>}, {pipeline_mode = #tpu.pipeline_mode<synchronous>, transform_indices = @transform_5, window_bounds = array<i64: 128, 128>}, {pipeline_mode = #tpu.pipeline_mode<synchronous>, transform_indices = @transform_6, window_bounds = array<i64: 1, 128>}, {transform_indices = @transform_7, window_bounds = array<i64: 8, 128>}, {transform_indices = @transform_8, window_bounds = array<i64: 8, 128>}, {transform_indices = @transform_9, window_bounds = array<i64: 8, 128>}]} {
    %c0 = arith.constant 0 : index
    %c0_0 = arith.constant 0 : index
    %0 = vector.load %arg4[%c0, %c0_0] : memref<1024x128xbf16, #tpu.memory_space<vmem>>, vector<1024x128xbf16>
    %c0_1 = arith.constant 0 : index
    %c0_2 = arith.constant 0 : index
    %1 = vector.load %arg5[%c0_1, %c0_2] : memref<1x128xf32, #tpu.memory_space<vmem>>, vector<1x128xf32>
    %c0_3 = arith.constant 0 : index
    %c0_4 = arith.constant 0 : index
    %2 = vector.load %arg6[%c0_3, %c0_4] : memref<128x128xbf16, #tpu.memory_space<vmem>>, vector<128x128xbf16>
    %c0_5 = arith.constant 0 : index
    %c0_6 = arith.constant 0 : index
    %3 = vector.load %arg7[%c0_5, %c0_6] : memref<1x128xf32, #tpu.memory_space<vmem>>, vector<1x128xf32>
    %c0_7 = arith.constant 0 : index
    %c0_8 = arith.constant 0 : index
    %4 = vector.load %arg1[%c0_7, %c0_8] : memref<8x1024xf32, #tpu.memory_space<vmem>>, vector<8x1024xf32>
    %5 = arith.truncf %4 : vector<8x1024xf32> to vector<8x1024xbf16>
    %cst = arith.constant dense<0.000000e+00> : vector<8x128xf32>
    %6 = tpu.matmul %5, %0, %cst {dimension_numbers = #tpu.dot_dimension_numbers<[1], [0], [0], [1], [0, 0, 1, 1], [], []>} : vector<8x1024xbf16>, vector<1024x128xbf16>, vector<8x128xf32> -> vector<8x128xf32>
    %7 = vector.broadcast %1 : vector<1x128xf32> to vector<8x128xf32>
    %8 = arith.addf %6, %7 : vector<8x128xf32>
    %cst_9 = arith.constant 0.000000e+00 : f32
    %9 = vector.broadcast %cst_9 : f32 to vector<8x128xf32>
    %10 = arith.maximumf %8, %9 : vector<8x128xf32>
    %11 = arith.truncf %10 : vector<8x128xf32> to vector<8x128xbf16>
    %cst_10 = arith.constant dense<0.000000e+00> : vector<8x128xf32>
    %12 = tpu.matmul %11, %2, %cst_10 {dimension_numbers = #tpu.dot_dimension_numbers<[1], [0], [0], [1], [0, 0, 1, 1], [], []>} : vector<8x128xbf16>, vector<128x128xbf16>, vector<8x128xf32> -> vector<8x128xf32>
    %13 = vector.broadcast %3 : vector<1x128xf32> to vector<8x128xf32>
    %14 = arith.addf %12, %13 : vector<8x128xf32>
    %c0_11 = arith.constant 0 : index
    %c0_12 = arith.constant 0 : index
    %15 = vector.load %arg8[%c0_11, %c0_12] : memref<8x128xf32, #tpu.memory_space<vmem>>, vector<8x128xf32>
    tpu.vector_store %arg8[%c0_11, %c0_12], %14 {strides = array<i32>} : memref<8x128xf32, #tpu.memory_space<vmem>>, vector<8x128xf32>,
    %c0_13 = arith.constant 0 : index
    %c0_14 = arith.constant 0 : index
    %16 = vector.load %arg2[%c0_13, %c0_14] : memref<8x1024xf32, #tpu.memory_space<vmem>>, vector<8x1024xf32>
    %17 = arith.truncf %16 : vector<8x1024xf32> to vector<8x1024xbf16>
    %cst_15 = arith.constant dense<0.000000e+00> : vector<8x128xf32>
    %18 = tpu.matmul %17, %0, %cst_15 {dimension_numbers = #tpu.dot_dimension_numbers<[1], [0], [0], [1], [0, 0, 1, 1], [], []>} : vector<8x1024xbf16>, vector<1024x128xbf16>, vector<8x128xf32> -> vector<8x128xf32>
    %19 = vector.broadcast %1 : vector<1x128xf32> to vector<8x128xf32>
    %20 = arith.addf %18, %19 : vector<8x128xf32>
    %cst_16 = arith.constant 0.000000e+00 : f32
    %21 = vector.broadcast %cst_16 : f32 to vector<8x128xf32>
    %22 = arith.maximumf %20, %21 : vector<8x128xf32>
    %23 = arith.truncf %22 : vector<8x128xf32> to vector<8x128xbf16>
    %cst_17 = arith.constant dense<0.000000e+00> : vector<8x128xf32>
    %24 = tpu.matmul %23, %2, %cst_17 {dimension_numbers = #tpu.dot_dimension_numbers<[1], [0], [0], [1], [0, 0, 1, 1], [], []>} : vector<8x128xbf16>, vector<128x128xbf16>, vector<8x128xf32> -> vector<8x128xf32>
    %25 = vector.broadcast %3 : vector<1x128xf32> to vector<8x128xf32>
    %26 = arith.addf %24, %25 : vector<8x128xf32>
    %c0_18 = arith.constant 0 : index
    %c0_19 = arith.constant 0 : index
    %27 = vector.load %arg9[%c0_18, %c0_19] : memref<8x128xf32, #tpu.memory_space<vmem>>, vector<8x128xf32>
    tpu.vector_store %arg9[%c0_18, %c0_19], %26 {strides = array<i32>} : memref<8x128xf32, #tpu.memory_space<vmem>>, vector<8x128xf32>,
    %c0_20 = arith.constant 0 : index
    %c0_21 = arith.constant 0 : index
    %28 = vector.load %arg3[%c0_20, %c0_21] : memref<8x1024xf32, #tpu.memory_space<vmem>>, vector<8x1024xf32>
    %29 = arith.truncf %28 : vector<8x1024xf32> to vector<8x1024xbf16>
    %cst_22 = arith.constant dense<0.000000e+00> : vector<8x128xf32>
    %30 = tpu.matmul %29, %0, %cst_22 {dimension_numbers = #tpu.dot_dimension_numbers<[1], [0], [0], [1], [0, 0, 1, 1], [], []>} : vector<8x1024xbf16>, vector<1024x128xbf16>, vector<8x128xf32> -> vector<8x128xf32>
    %31 = vector.broadcast %1 : vector<1x128xf32> to vector<8x128xf32>
    %32 = arith.addf %30, %31 : vector<8x128xf32>
    %cst_23 = arith.constant 0.000000e+00 : f32
    %33 = vector.broadcast %cst_23 : f32 to vector<8x128xf32>
    %34 = arith.maximumf %32, %33 : vector<8x128xf32>
    %35 = arith.truncf %34 : vector<8x128xf32> to vector<8x128xbf16>
    %cst_24 = arith.constant dense<0.000000e+00> : vector<8x128xf32>
    %36 = tpu.matmul %35, %2, %cst_24 {dimension_numbers = #tpu.dot_dimension_numbers<[1], [0], [0], [1], [0, 0, 1, 1], [], []>} : vector<8x128xbf16>, vector<128x128xbf16>, vector<8x128xf32> -> vector<8x128xf32>
    %37 = vector.broadcast %3 : vector<1x128xf32> to vector<8x128xf32>
    %38 = arith.addf %36, %37 : vector<8x128xf32>
    %c0_25 = arith.constant 0 : index
    %c0_26 = arith.constant 0 : index
    %39 = vector.load %arg10[%c0_25, %c0_26] : memref<8x128xf32, #tpu.memory_space<vmem>>, vector<8x128xf32>
    tpu.vector_store %arg10[%c0_25, %c0_26], %38 {strides = array<i32>} : memref<8x128xf32, #tpu.memory_space<vmem>>, vector<8x128xf32>,
    return
  }
  func.func @transform_0(%arg0: i32) -> (i32, i32) {
    %c0_i32 = arith.constant 0 : i32
    %c0_i32_0 = arith.constant 0 : i32
    return %arg0, %c0_i32 : i32, i32
  }
  func.func @transform_1(%arg0: i32) -> (i32, i32) {
    %c0_i32 = arith.constant 0 : i32
    %c0_i32_0 = arith.constant 0 : i32
    return %arg0, %c0_i32 : i32, i32
  }
  func.func @transform_2(%arg0: i32) -> (i32, i32) {
    %c0_i32 = arith.constant 0 : i32
    %c0_i32_0 = arith.constant 0 : i32
    return %arg0, %c0_i32 : i32, i32
  }
  func.func @transform_3(%arg0: i32) -> (i32, i32) {
    %c0_i32 = arith.constant 0 : i32
    %c0_i32_0 = arith.constant 0 : i32
    %c0_i32_1 = arith.constant 0 : i32
    return %c0_i32, %c0_i32_0 : i32, i32
  }
  func.func @transform_4(%arg0: i32) -> (i32, i32) {
    %c0_i32 = arith.constant 0 : i32
    %c0_i32_0 = arith.constant 0 : i32
    %c0_i32_1 = arith.constant 0 : i32
    return %c0_i32, %c0_i32_0 : i32, i32
  }
  func.func @transform_5(%arg0: i32) -> (i32, i32) {
    %c0_i32 = arith.constant 0 : i32
    %c0_i32_0 = arith.constant 0 : i32
    %c0_i32_1 = arith.constant 0 : i32
    return %c0_i32, %c0_i32_0 : i32, i32
  }
  func.func @transform_6(%arg0: i32) -> (i32, i32) {
    %c0_i32 = arith.constant 0 : i32
    %c0_i32_0 = arith.constant 0 : i32
    %c0_i32_1 = arith.constant 0 : i32
    return %c0_i32, %c0_i32_0 : i32, i32
  }
  func.func @transform_7(%arg0: i32) -> (i32, i32) {
    %c0_i32 = arith.constant 0 : i32
    %c0_i32_0 = arith.constant 0 : i32
    return %arg0, %c0_i32 : i32, i32
  }
  func.func @transform_8(%arg0: i32) -> (i32, i32) {
    %c0_i32 = arith.constant 0 : i32
    %c0_i32_0 = arith.constant 0 : i32
    return %arg0, %c0_i32 : i32, i32
  }
  func.func @transform_9(%arg0: i32) -> (i32, i32) {
    %c0_i32 = arith.constant 0 : i32
    %c0_i32_0 = arith.constant 0 : i32
    return %arg0, %c0_i32 : i32, i32
  }
}

</mosaic_0001>

<llo_original>
// kernel: tpu_custom_call.1
$region0: #{tpu_custom_call.1}
  #allocation0 [shape = 'u32[]', space=smem, size = 0x4, offset = 0x4, fixed_abs, tag = 'smem constant byte address 0x4 - core index']
  #allocation1 [shape = 'u32[144,128]{1,0:T(1,128)}', space=vmem, size = 0x12000, scoped, tag = 'internal scratch']
  %s0 = inlined_call_operand.hbm [shape: f32[8,1024], index: 0, kind: input, shape index: {}]
  %s1 = inlined_call_operand.hbm [shape: f32[8,1024], index: 1, kind: input, shape index: {}]
  %s2 = inlined_call_operand.hbm [shape: f32[8,1024], index: 2, kind: input, shape index: {}]
  %s3 = inlined_call_operand.hbm [shape: bf16[1024,128], index: 3, kind: input, shape index: {}]
  %s4 = inlined_call_operand.vmem [shape: f32[1,128], index: 4, kind: input, shape index: {}]
  %s5 = inlined_call_operand.hbm [shape: bf16[128,128], index: 5, kind: input, shape index: {}]
  %s6 = inlined_call_operand.vmem [shape: f32[1,128], index: 6, kind: input, shape index: {}]
  %s7 = inlined_call_operand.hbm [shape: f32[8,128], index: 7, kind: output, shape index: {0}]
  %s8 = inlined_call_operand.hbm [shape: f32[8,128], index: 8, kind: output, shape index: {1}]
  %s9 = inlined_call_operand.hbm [shape: f32[8,128], index: 9, kind: output, shape index: {2}]
  %10 = xla_tuple %s7, %s8, %s9
  %s11 = sld [smem:[#allocation0]]
  $region74: #{tpu_custom_call.1} parent=0
    _
  %s13 = ssub.s32 1, %s11
  %s14 = scalar_select 0, %s13, %s11
  $region1: #{tpu_custom_call.1} parent=0
    #allocation2 [shape = 'u8[32768]{0}', space=vmem, size = 0x8000, scoped, tag = 'input window, operand 0, single buffered']
    #allocation3 [shape = 's32[1]{0}', space=sflag, size = 0x4, scoped, tag = 'scoped memory for tpu_custom_call.1']
    #allocation4 [shape = 's32[1]{0}', space=sflag, size = 0x4, scoped, tag = 'scoped memory for tpu_custom_call.1']
    #allocation5 [shape = 'u8[32768]{0}', space=vmem, size = 0x8000, scoped, tag = 'input window, operand 1, single buffered']
    #allocation6 [shape = 's32[1]{0}', space=sflag, size = 0x4, scoped, tag = 'scoped memory for tpu_custom_call.1']
    #allocation7 [shape = 'u8[32768]{0}', space=vmem, size = 0x8000, scoped, tag = 'input window, operand 2, single buffered']
    #allocation8 [shape = 'u8[262144]{0}', space=vmem, size = 0x40000, scoped, tag = 'input window, operand 3, single buffered']
    #allocation9 [shape = 's32[1]{0}', space=sflag, size = 0x4, scoped, tag = 'scoped memory for tpu_custom_call.1']
    #allocation10 [shape = 'u8[32768]{0}', space=vmem, size = 0x8000, scoped, tag = 'input window, operand 5, single buffered']
    #allocation11 [shape = 'u8[4096]{0}', space=vmem, size = 0x1000, scoped, tag = 'output window, operand 0, single buffered']
    #allocation12 [shape = 'u8[4096]{0}', space=vmem, size = 0x1000, scoped, tag = 'output window, operand 1, single buffered']
    #allocation13 [shape = 's32[1]{0}', space=sflag, size = 0x4, scoped, tag = 'scoped memory for tpu_custom_call.1']
    #allocation14 [shape = 'u8[4096]{0}', space=vmem, size = 0x1000, scoped, tag = 'output window, operand 2, single buffered']
    %15 = vsyncpa [#allocation3], 0
    %16 = vsyncpa [#allocation6], 0
    %17 = vsyncpa [#allocation9], 0
    %18 = vsyncpa [#allocation4], 0
    %19 = vsyncpa [#allocation13], 0
    // Predicated region
    $region2: #{tpu_custom_call.1} parent=1 // pred_check
      _
    $region3: #{tpu_custom_call.1} parent=1 // pred_check_branch
      %21 = sbr.rel (0) target = $region5
    $region4: #{tpu_custom_call.1} parent=1 // pred_region
      %s23 = ssub.s32 1024, 1024
      %24 = vsyncadd [#allocation3], %s23
      %s26 = sshll.u32 [#allocation2], 4
      %s27 = int_to_ptr.vmem [resolvable:$true] %s26
      %29 = dma.hbm_to_vmem [thread:$0]  %s0, 1024, %s27, [#allocation3]
    $region5: #{tpu_custom_call.1} parent=1 // pred_fallthru
      _
    // Predicated region
    $region6: #{tpu_custom_call.1} parent=1 // pred_check
      _
    $region7: #{tpu_custom_call.1} parent=1 // pred_check_branch
      %31 = sbr.rel (0) target = $region9
    $region8: #{tpu_custom_call.1} parent=1 // pred_region
      %s33 = ssub.s32 1024, 1024
      %34 = vsyncadd [#allocation6], %s33
      %s36 = sshll.u32 [#allocation5], 4
      %s37 = int_to_ptr.vmem [resolvable:$true] %s36
      %39 = dma.hbm_to_vmem [thread:$0]  %s1, 1024, %s37, [#allocation6]
    $region9: #{tpu_custom_call.1} parent=1 // pred_fallthru
      _
    // Predicated region
    $region10: #{tpu_custom_call.1} parent=1 // pred_check
      _
    $region11: #{tpu_custom_call.1} parent=1 // pred_check_branch
      %41 = sbr.rel (0) target = $region13
    $region12: #{tpu_custom_call.1} parent=1 // pred_region
      %s43 = ssub.s32 1024, 1024
      %44 = vsyncadd [#allocation6], %s43
      %s46 = sshll.u32 [#allocation7], 4
      %s47 = int_to_ptr.vmem [resolvable:$true] %s46
      %49 = dma.hbm_to_vmem [thread:$0]  %s2, 1024, %s47, [#allocation6]
    $region13: #{tpu_custom_call.1} parent=1 // pred_fallthru
      _
    // Predicated region
    $region14: #{tpu_custom_call.1} parent=1 // pred_check
      _
    $region15: #{tpu_custom_call.1} parent=1 // pred_check_branch
      %51 = sbr.rel (0) target = $region17
    $region16: #{tpu_custom_call.1} parent=1 // pred_region
      %s53 = ssub.s32 8192, 8192
      %54 = vsyncadd [#allocation9], %s53
      %s55 = sshll.u32 [#allocation8], 4
      %s56 = int_to_ptr.vmem [resolvable:$true] %s55
      %61 = dma.hbm_to_vmem [thread:$0]  %s3, 8192, %s56, [#allocation9], 64, 64, 4
    $region17: #{tpu_custom_call.1} parent=1 // pred_fallthru
      _
    // Predicated region
    $region18: #{tpu_custom_call.1} parent=1 // pred_check
      _
    $region19: #{tpu_custom_call.1} parent=1 // pred_check_branch
      %63 = sbr.rel (0) target = $region21
    $region20: #{tpu_custom_call.1} parent=1 // pred_region
      _
    $region21: #{tpu_custom_call.1} parent=1 // pred_fallthru
      _
    // Predicated region
    $region22: #{tpu_custom_call.1} parent=1 // pred_check
      _
    $region23: #{tpu_custom_call.1} parent=1 // pred_check_branch
      %65 = sbr.rel (0) target = $region25
    $region24: #{tpu_custom_call.1} parent=1 // pred_region
      %s67 = ssub.s32 1024, 1024
      %68 = vsyncadd [#allocation9], %s67
      %s69 = sshll.u32 [#allocation10], 4
      %s70 = int_to_ptr.vmem [resolvable:$true] %s69
      %75 = dma.hbm_to_vmem [thread:$0]  %s5, 1024, %s70, [#allocation9], 64, 64, 4
    $region25: #{tpu_custom_call.1} parent=1 // pred_fallthru
      _
    // Predicated region
    $region26: #{tpu_custom_call.1} parent=1 // pred_check
      _
    $region27: #{tpu_custom_call.1} parent=1 // pred_check_branch
      %77 = sbr.rel (0) target = $region29
    $region28: #{tpu_custom_call.1} parent=1 // pred_region
      _
    $region29: #{tpu_custom_call.1} parent=1 // pred_fallthru
      _
    // Predicated region
    $region30: #{tpu_custom_call.1} parent=1 // pred_check
      _
    $region31: #{tpu_custom_call.1} parent=1 // pred_check_branch
      %79 = sbr.rel (0) target = $region33
    $region32: #{tpu_custom_call.1} parent=1 // pred_region
      %80 = dma.done [#allocation3], 1024
    $region33: #{tpu_custom_call.1} parent=1 // pred_fallthru
      _
    // Predicated region
    $region34: #{tpu_custom_call.1} parent=1 // pred_check
      _
    $region35: #{tpu_custom_call.1} parent=1 // pred_check_branch
      %82 = sbr.rel (0) target = $region37
    $region36: #{tpu_custom_call.1} parent=1 // pred_region
      %83 = dma.done [#allocation6], 1024
    $region37: #{tpu_custom_call.1} parent=1 // pred_fallthru
      _
    // Predicated region
    $region38: #{tpu_custom_call.1} parent=1 // pred_check
      _
    $region39: #{tpu_custom_call.1} parent=1 // pred_check_branch
      %85 = sbr.rel (0) target = $region41
    $region40: #{tpu_custom_call.1} parent=1 // pred_region
      %86 = dma.done [#allocation6], 1024
    $region41: #{tpu_custom_call.1} parent=1 // pred_fallthru
      _
    // Predicated region
    $region42: #{tpu_custom_call.1} parent=1 // pred_check
      _
    $region43: #{tpu_custom_call.1} parent=1 // pred_check_branch
      %88 = sbr.rel (0) target = $region45
    $region44: #{tpu_custom_call.1} parent=1 // pred_region
      %89 = dma.done [#allocation9], 8192
    $region45: #{tpu_custom_call.1} parent=1 // pred_fallthru
      _
    // Predicated region
    $region46: #{tpu_custom_call.1} parent=1 // pred_check
      _
    $region47: #{tpu_custom_call.1} parent=1 // pred_check_branch
      %91 = sbr.rel (0) target = $region49
    $region48: #{tpu_custom_call.1} parent=1 // pred_region
      %92 = dma.done [#allocation9], 1024
    $region49: #{tpu_custom_call.1} parent=1 // pred_fallthru
      _
    %v94 = vld [vmem:[#allocation8] sm:$0xf]
    %v95 = vld [vmem:[#allocation8 + $0x4] sm:$0xf]
    %v96 = vld [vmem:[#allocation8 + $0x8] sm:$0xf]
    %v97 = vld [vmem:[#allocation8 + $0xc] sm:$0xf]
    %v98 = vld [vmem:[#allocation8 + $0x10] sm:$0xf]
    %v99 = vld [vmem:[#allocation8 + $0x14] sm:$0xf]
    %v100 = vld [vmem:[#allocation8 + $0x18] sm:$0xf]
    %v101 = vld [vmem:[#allocation8 + $0x1c] sm:$0xf]
    %v102 = vld [vmem:[#allocation8 + $0x20] sm:$0xf]
    %v103 = vld [vmem:[#allocation8 + $0x24] sm:$0xf]
    %v104 = vld [vmem:[#allocation8 + $0x28] sm:$0xf]
    %v105 = vld [vmem:[#allocation8 + $0x2c] sm:$0xf]
    %v106 = vld [vmem:[#allocation8 + $0x30] sm:$0xf]
    %v107 = vld [vmem:[#allocation8 + $0x34] sm:$0xf]
    %v108 = vld [vmem:[#allocation8 + $0x38] sm:$0xf]
    %v109 = vld [vmem:[#allocation8 + $0x3c] sm:$0xf]
    %v110 = vld [vmem:[#allocation8 + $0x40] sm:$0xf]
    %v111 = vld [vmem:[#allocation8 + $0x44] sm:$0xf]
    %v112 = vld [vmem:[#allocation8 + $0x48] sm:$0xf]
    %v113 = vld [vmem:[#allocation8 + $0x4c] sm:$0xf]
    %v114 = vld [vmem:[#allocation8 + $0x50] sm:$0xf]
    %v115 = vld [vmem:[#allocation8 + $0x54] sm:$0xf]
    %v116 = vld [vmem:[#allocation8 + $0x58] sm:$0xf]
    %v117 = vld [vmem:[#allocation8 + $0x5c] sm:$0xf]
    %v118 = vld [vmem:[#allocation8 + $0x60] sm:$0xf]
    %v119 = vld [vmem:[#allocation8 + $0x64] sm:$0xf]
    %v120 = vld [vmem:[#allocation8 + $0x68] sm:$0xf]
    %v121 = vld [vmem:[#allocation8 + $0x6c] sm:$0xf]
    %v122 = vld [vmem:[#allocation8 + $0x70] sm:$0xf]
    %v123 = vld [vmem:[#allocation8 + $0x74] sm:$0xf]
    %v124 = vld [vmem:[#allocation8 + $0x78] sm:$0xf]
    %v125 = vld [vmem:[#allocation8 + $0x7c] sm:$0xf]
    %v126 = vld [vmem:[#allocation8 + $0x80] sm:$0xf]
    %v127 = vld [vmem:[#allocation8 + $0x84] sm:$0xf]
    %v128 = vld [vmem:[#allocation8 + $0x88] sm:$0xf]
    %v129 = vld [vmem:[#allocation8 + $0x8c] sm:$0xf]
    %v130 = vld [vmem:[#allocation8 + $0x90] sm:$0xf]
    %v131 = vld [vmem:[#allocation8 + $0x94] sm:$0xf]
    %v132 = vld [vmem:[#allocation8 + $0x98] sm:$0xf]
    %v133 = vld [vmem:[#allocation8 + $0x9c] sm:$0xf]
    %v134 = vld [vmem:[#allocation8 + $0xa0] sm:$0xf]
    %v135 = vld [vmem:[#allocation8 + $0xa4] sm:$0xf]
    %v136 = vld [vmem:[#allocation8 + $0xa8] sm:$0xf]
    %v137 = vld [vmem:[#allocation8 + $0xac] sm:$0xf]
    %v138 = vld [vmem:[#allocation8 + $0xb0] sm:$0xf]
    %v139 = vld [vmem:[#allocation8 + $0xb4] sm:$0xf]
    %v140 = vld [vmem:[#allocation8 + $0xb8] sm:$0xf]
    %v141 = vld [vmem:[#allocation8 + $0xbc] sm:$0xf]
    %v142 = vld [vmem:[#allocation8 + $0xc0] sm:$0xf]
    %v143 = vld [vmem:[#allocation8 + $0xc4] sm:$0xf]
    %v144 = vld [vmem:[#allocation8 + $0xc8] sm:$0xf]
    %v145 = vld [vmem:[#allocation8 + $0xcc] sm:$0xf]
    %v146 = vld [vmem:[#allocation8 + $0xd0] sm:$0xf]
    %v147 = vld [vmem:[#allocation8 + $0xd4] sm:$0xf]
    %v148 = vld [vmem:[#allocation8 + $0xd8] sm:$0xf]
    %v149 = vld [vmem:[#allocation8 + $0xdc] sm:$0xf]
    %v150 = vld [vmem:[#allocation8 + $0xe0] sm:$0xf]
    %v151 = vld [vmem:[#allocation8 + $0xe4] sm:$0xf]
    %v152 = vld [vmem:[#allocation8 + $0xe8] sm:$0xf]
    %v153 = vld [vmem:[#allocation8 + $0xec] sm:$0xf]
    %v154 = vld [vmem:[#allocation8 + $0xf0] sm:$0xf]
    %v155 = vld [vmem:[#allocation8 + $0xf4] sm:$0xf]
    %v156 = vld [vmem:[#allocation8 + $0xf8] sm:$0xf]
    %v157 = vld [vmem:[#allocation8 + $0xfc] sm:$0xf]
    %v158 = vld [vmem:[#allocation8 + $0x100] sm:$0xf]
    %v159 = vld [vmem:[#allocation8 + $0x104] sm:$0xf]
    %v160 = vld [vmem:[#allocation8 + $0x108] sm:$0xf]
    %v161 = vld [vmem:[#allocation8 + $0x10c] sm:$0xf]
    %v162 = vld [vmem:[#allocation8 + $0x110] sm:$0xf]
    %v163 = vld [vmem:[#allocation8 + $0x114] sm:$0xf]
    %v164 = vld [vmem:[#allocation8 + $0x118] sm:$0xf]
    %v165 = vld [vmem:[#allocation8 + $0x11c] sm:$0xf]
    %v166 = vld [vmem:[#allocation8 + $0x120] sm:$0xf]
    %v167 = vld [vmem:[#allocation8 + $0x124] sm:$0xf]
    %v168 = vld [vmem:[#allocation8 + $0x128] sm:$0xf]
    %v169 = vld [vmem:[#allocation8 + $0x12c] sm:$0xf]
    %v170 = vld [vmem:[#allocation8 + $0x130] sm:$0xf]
    %v171 = vld [vmem:[#allocation8 + $0x134] sm:$0xf]
    %v172 = vld [vmem:[#allocation8 + $0x138] sm:$0xf]
    %v173 = vld [vmem:[#allocation8 + $0x13c] sm:$0xf]
    %v174 = vld [vmem:[#allocation8 + $0x140] sm:$0xf]
    %v175 = vld [vmem:[#allocation8 + $0x144] sm:$0xf]
    %v176 = vld [vmem:[#allocation8 + $0x148] sm:$0xf]
    %v177 = vld [vmem:[#allocation8 + $0x14c] sm:$0xf]
    %v178 = vld [vmem:[#allocation8 + $0x150] sm:$0xf]
    %v179 = vld [vmem:[#allocation8 + $0x154] sm:$0xf]
    %v180 = vld [vmem:[#allocation8 + $0x158] sm:$0xf]
    %v181 = vld [vmem:[#allocation8 + $0x15c] sm:$0xf]
    %v182 = vld [vmem:[#allocation8 + $0x160] sm:$0xf]
    %v183 = vld [vmem:[#allocation8 + $0x164] sm:$0xf]
    %v184 = vld [vmem:[#allocation8 + $0x168] sm:$0xf]
    %v185 = vld [vmem:[#allocation8 + $0x16c] sm:$0xf]
    %v186 = vld [vmem:[#allocation8 + $0x170] sm:$0xf]
    %v187 = vld [vmem:[#allocation8 + $0x174] sm:$0xf]
    %v188 = vld [vmem:[#allocation8 + $0x178] sm:$0xf]
    %v189 = vld [vmem:[#allocation8 + $0x17c] sm:$0xf]
    %v190 = vld [vmem:[#allocation8 + $0x180] sm:$0xf]
    %v191 = vld [vmem:[#allocation8 + $0x184] sm:$0xf]
    %v192 = vld [vmem:[#allocation8 + $0x188] sm:$0xf]
    %v193 = vld [vmem:[#allocation8 + $0x18c] sm:$0xf]
    %v194 = vld [vmem:[#allocation8 + $0x190] sm:$0xf]
    %v195 = vld [vmem:[#allocation8 + $0x194] sm:$0xf]
    %v196 = vld [vmem:[#allocation8 + $0x198] sm:$0xf]
    %v197 = vld [vmem:[#allocation8 + $0x19c] sm:$0xf]
    %v198 = vld [vmem:[#allocation8 + $0x1a0] sm:$0xf]
    %v199 = vld [vmem:[#allocation8 + $0x1a4] sm:$0xf]
    %v200 = vld [vmem:[#allocation8 + $0x1a8] sm:$0xf]
    %v201 = vld [vmem:[#allocation8 + $0x1ac] sm:$0xf]
    %v202 = vld [vmem:[#allocation8 + $0x1b0] sm:$0xf]
    %v203 = vld [vmem:[#allocation8 + $0x1b4] sm:$0xf]
    %v204 = vld [vmem:[#allocation8 + $0x1b8] sm:$0xf]
    %v205 = vld [vmem:[#allocation8 + $0x1bc] sm:$0xf]
    %v206 = vld [vmem:[#allocation8 + $0x1c0] sm:$0xf]
    %v207 = vld [vmem:[#allocation8 + $0x1c4] sm:$0xf]
    %v208 = vld [vmem:[#allocation8 + $0x1c8] sm:$0xf]
    %v209 = vld [vmem:[#allocation8 + $0x1cc] sm:$0xf]
    %v210 = vld [vmem:[#allocation8 + $0x1d0] sm:$0xf]
    %v211 = vld [vmem:[#allocation8 + $0x1d4] sm:$0xf]
    %v212 = vld [vmem:[#allocation8 + $0x1d8] sm:$0xf]
    %v213 = vld [vmem:[#allocation8 + $0x1dc] sm:$0xf]
    %v214 = vld [vmem:[#allocation8 + $0x1e0] sm:$0xf]
    %v215 = vld [vmem:[#allocation8 + $0x1e4] sm:$0xf]
    %v216 = vld [vmem:[#allocation8 + $0x1e8] sm:$0xf]
    %v217 = vld [vmem:[#allocation8 + $0x1ec] sm:$0xf]
    %v218 = vld [vmem:[#allocation8 + $0x1f0] sm:$0xf]
    %v219 = vld [vmem:[#allocation8 + $0x1f4] sm:$0xf]
    %v220 = vld [vmem:[#allocation8 + $0x1f8] sm:$0xf]
    %v221 = vld [vmem:[#allocation8 + $0x1fc] sm:$0xf]
    %v222 = vld [vmem:[%s4] sm:$0x1]
    %v223 = vld [vmem:[#allocation10] sm:$0xf]
    %v224 = vld [vmem:[#allocation10 + $0x4] sm:$0xf]
    %v225 = vld [vmem:[#allocation10 + $0x8] sm:$0xf]
    %v226 = vld [vmem:[#allocation10 + $0xc] sm:$0xf]
    %v227 = vld [vmem:[#allocation10 + $0x10] sm:$0xf]
    %v228 = vld [vmem:[#allocation10 + $0x14] sm:$0xf]
    %v229 = vld [vmem:[#allocation10 + $0x18] sm:$0xf]
    %v230 = vld [vmem:[#allocation10 + $0x1c] sm:$0xf]
    %v231 = vld [vmem:[#allocation10 + $0x20] sm:$0xf]
    %v232 = vld [vmem:[#allocation10 + $0x24] sm:$0xf]
    %v233 = vld [vmem:[#allocation10 + $0x28] sm:$0xf]
    %v234 = vld [vmem:[#allocation10 + $0x2c] sm:$0xf]
    %v235 = vld [vmem:[#allocation10 + $0x30] sm:$0xf]
    %v236 = vld [vmem:[#allocation10 + $0x34] sm:$0xf]
    %v237 = vld [vmem:[#allocation10 + $0x38] sm:$0xf]
    %v238 = vld [vmem:[#allocation10 + $0x3c] sm:$0xf]
    %v239 = vld [vmem:[%s6] sm:$0x1]
    %v240 = vld [vmem:[#allocation2] sm:$0xff]
    %v241 = vld [vmem:[#allocation2 + $0x8] sm:$0xff]
    %v242 = vld [vmem:[#allocation2 + $0x10] sm:$0xff]
    %v243 = vld [vmem:[#allocation2 + $0x18] sm:$0xff]
    %v244 = vld [vmem:[#allocation2 + $0x20] sm:$0xff]
    %v245 = vld [vmem:[#allocation2 + $0x28] sm:$0xff]
    %v246 = vld [vmem:[#allocation2 + $0x30] sm:$0xff]
    %v247 = vld [vmem:[#allocation2 + $0x38] sm:$0xff]
    %v248 = vpack.c.bf16 %v240, %v240
    %v249 = vpack.c.bf16 %v241, %v241
    %v250 = vpack.c.bf16 %v242, %v242
    %v251 = vpack.c.bf16 %v243, %v243
    %v252 = vpack.c.bf16 %v244, %v244
    %v253 = vpack.c.bf16 %v245, %v245
    %v254 = vpack.c.bf16 %v246, %v246
    %v255 = vpack.c.bf16 %v247, %v247
    %v257 = vlaneseq
    %v258 = vshrl.u32 %v257, 7
    %v259 = vsub.s32 0, %v258
    %v260 = vrot.slane %v222, %v259
    %v390 = vunpack.c.l.b16 %v94
    %v391 = vunpack.c.l.b16 %v95
    %v392 = vunpack.c.l.b16 %v96
    %v393 = vunpack.c.l.b16 %v97
    %v394 = vunpack.c.l.b16 %v98
    %v395 = vunpack.c.l.b16 %v99
    %v396 = vunpack.c.l.b16 %v100
    %v397 = vunpack.c.l.b16 %v101
    %v398 = vunpack.c.l.b16 %v102
    %v399 = vunpack.c.l.b16 %v103
    %v400 = vunpack.c.l.b16 %v104
    %v401 = vunpack.c.l.b16 %v105
    %v402 = vunpack.c.l.b16 %v106
    %v403 = vunpack.c.l.b16 %v107
    %v404 = vunpack.c.l.b16 %v108
    %v405 = vunpack.c.l.b16 %v109
    %v406 = vunpack.c.l.b16 %v110
    %v407 = vunpack.c.l.b16 %v111
    %v408 = vunpack.c.l.b16 %v112
    %v409 = vunpack.c.l.b16 %v113
    %v410 = vunpack.c.l.b16 %v114
    %v411 = vunpack.c.l.b16 %v115
    %v412 = vunpack.c.l.b16 %v116
    %v413 = vunpack.c.l.b16 %v117
    %v414 = vunpack.c.l.b16 %v118
    %v415 = vunpack.c.l.b16 %v119
    %v416 = vunpack.c.l.b16 %v120
    %v417 = vunpack.c.l.b16 %v121
    %v418 = vunpack.c.l.b16 %v122
    %v419 = vunpack.c.l.b16 %v123
    %v420 = vunpack.c.l.b16 %v124
    %v421 = vunpack.c.l.b16 %v125
    %v422 = vunpack.c.l.b16 %v126
    %v423 = vunpack.c.l.b16 %v127
    %v424 = vunpack.c.l.b16 %v128
    %v425 = vunpack.c.l.b16 %v129
    %v426 = vunpack.c.l.b16 %v130
    %v427 = vunpack.c.l.b16 %v131
    %v428 = vunpack.c.l.b16 %v132
    %v429 = vunpack.c.l.b16 %v133
    %v430 = vunpack.c.l.b16 %v134
    %v431 = vunpack.c.l.b16 %v135
    %v432 = vunpack.c.l.b16 %v136
    %v433 = vunpack.c.l.b16 %v137
    %v434 = vunpack.c.l.b16 %v138
    %v435 = vunpack.c.l.b16 %v139
    %v436 = vunpack.c.l.b16 %v140
    %v437 = vunpack.c.l.b16 %v141
    %v438 = vunpack.c.l.b16 %v142
    %v439 = vunpack.c.l.b16 %v143
    %v440 = vunpack.c.l.b16 %v144
    %v441 = vunpack.c.l.b16 %v145
    %v442 = vunpack.c.l.b16 %v146
    %v443 = vunpack.c.l.b16 %v147
    %v444 = vunpack.c.l.b16 %v148
    %v445 = vunpack.c.l.b16 %v149
    %v446 = vunpack.c.l.b16 %v150
    %v447 = vunpack.c.l.b16 %v151
    %v448 = vunpack.c.l.b16 %v152
    %v449 = vunpack.c.l.b16 %v153
    %v450 = vunpack.c.l.b16 %v154
    %v451 = vunpack.c.l.b16 %v155
    %v452 = vunpack.c.l.b16 %v156
    %v453 = vunpack.c.l.b16 %v157
    %v454 = vunpack.c.l.b16 %v158
    %v455 = vunpack.c.l.b16 %v159
    %v456 = vunpack.c.l.b16 %v160
    %v457 = vunpack.c.l.b16 %v161
    %v458 = vunpack.c.l.b16 %v162
    %v459 = vunpack.c.l.b16 %v163
    %v460 = vunpack.c.l.b16 %v164
    %v461 = vunpack.c.l.b16 %v165
    %v462 = vunpack.c.l.b16 %v166
    %v463 = vunpack.c.l.b16 %v167
    %v464 = vunpack.c.l.b16 %v168
    %v465 = vunpack.c.l.b16 %v169
    %v466 = vunpack.c.l.b16 %v170
    %v467 = vunpack.c.l.b16 %v171
    %v468 = vunpack.c.l.b16 %v172
    %v469 = vunpack.c.l.b16 %v173
    %v470 = vunpack.c.l.b16 %v174
    %v471 = vunpack.c.l.b16 %v175
    %v472 = vunpack.c.l.b16 %v176
    %v473 = vunpack.c.l.b16 %v177
    %v474 = vunpack.c.l.b16 %v178
    %v475 = vunpack.c.l.b16 %v179
    %v476 = vunpack.c.l.b16 %v180
    %v477 = vunpack.c.l.b16 %v181
    %v478 = vunpack.c.l.b16 %v182
    %v479 = vunpack.c.l.b16 %v183
    %v480 = vunpack.c.l.b16 %v184
    %v481 = vunpack.c.l.b16 %v185
    %v482 = vunpack.c.l.b16 %v186
    %v483 = vunpack.c.l.b16 %v187
    %v484 = vunpack.c.l.b16 %v188
    %v485 = vunpack.c.l.b16 %v189
    %v486 = vunpack.c.l.b16 %v190
    %v487 = vunpack.c.l.b16 %v191
    %v488 = vunpack.c.l.b16 %v192
    %v489 = vunpack.c.l.b16 %v193
    %v490 = vunpack.c.l.b16 %v194
    %v491 = vunpack.c.l.b16 %v195
    %v492 = vunpack.c.l.b16 %v196
    %v493 = vunpack.c.l.b16 %v197
    %v494 = vunpack.c.l.b16 %v198
    %v495 = vunpack.c.l.b16 %v199
    %v496 = vunpack.c.l.b16 %v200
    %v497 = vunpack.c.l.b16 %v201
    %v498 = vunpack.c.l.b16 %v202
    %v499 = vunpack.c.l.b16 %v203
    %v500 = vunpack.c.l.b16 %v204
    %v501 = vunpack.c.l.b16 %v205
    %v502 = vunpack.c.l.b16 %v206
    %v503 = vunpack.c.l.b16 %v207
    %v504 = vunpack.c.l.b16 %v208
    %v505 = vunpack.c.l.b16 %v209
    %v506 = vunpack.c.l.b16 %v210
    %v507 = vunpack.c.l.b16 %v211
    %v508 = vunpack.c.l.b16 %v212
    %v509 = vunpack.c.l.b16 %v213
    %v510 = vunpack.c.l.b16 %v214
    %v511 = vunpack.c.l.b16 %v215
    %v512 = vunpack.c.l.b16 %v216
    %v513 = vunpack.c.l.b16 %v217
    %v514 = vunpack.c.l.b16 %v218
    %v515 = vunpack.c.l.b16 %v219
    %v516 = vunpack.c.l.b16 %v220
    %v517 = vunpack.c.l.b16 %v221
    %v518 = vpack.c.b16 %v391, %v390
    %v519 = vpack.c.b16 %v393, %v392
    %v520 = vpack.c.b16 %v395, %v394
    %v521 = vpack.c.b16 %v397, %v396
    %v522 = vpack.c.b16 %v399, %v398
    %v523 = vpack.c.b16 %v401, %v400
    %v524 = vpack.c.b16 %v403, %v402
    %v525 = vpack.c.b16 %v405, %v404
    %v526 = vpack.c.b16 %v407, %v406
    %v527 = vpack.c.b16 %v409, %v408
    %v528 = vpack.c.b16 %v411, %v410
    %v529 = vpack.c.b16 %v413, %v412
    %v530 = vpack.c.b16 %v415, %v414
    %v531 = vpack.c.b16 %v417, %v416
    %v532 = vpack.c.b16 %v419, %v418
    %v533 = vpack.c.b16 %v421, %v420
    %v534 = vpack.c.b16 %v423, %v422
    %v535 = vpack.c.b16 %v425, %v424
    %v536 = vpack.c.b16 %v427, %v426
    %v537 = vpack.c.b16 %v429, %v428
    %v538 = vpack.c.b16 %v431, %v430
    %v539 = vpack.c.b16 %v433, %v432
    %v540 = vpack.c.b16 %v435, %v434
    %v541 = vpack.c.b16 %v437, %v436
    %v542 = vpack.c.b16 %v439, %v438
    %v543 = vpack.c.b16 %v441, %v440
    %v544 = vpack.c.b16 %v443, %v442
    %v545 = vpack.c.b16 %v445, %v444
    %v546 = vpack.c.b16 %v447, %v446
    %v547 = vpack.c.b16 %v449, %v448
    %v548 = vpack.c.b16 %v451, %v450
    %v549 = vpack.c.b16 %v453, %v452
    %v550 = vpack.c.b16 %v455, %v454
    %v551 = vpack.c.b16 %v457, %v456
    %v552 = vpack.c.b16 %v459, %v458
    %v553 = vpack.c.b16 %v461, %v460
    %v554 = vpack.c.b16 %v463, %v462
    %v555 = vpack.c.b16 %v465, %v464
    %v556 = vpack.c.b16 %v467, %v466
    %v557 = vpack.c.b16 %v469, %v468
    %v558 = vpack.c.b16 %v471, %v470
    %v559 = vpack.c.b16 %v473, %v472
    %v560 = vpack.c.b16 %v475, %v474
    %v561 = vpack.c.b16 %v477, %v476
    %v562 = vpack.c.b16 %v479, %v478
    %v563 = vpack.c.b16 %v481, %v480
    %v564 = vpack.c.b16 %v483, %v482
    %v565 = vpack.c.b16 %v485, %v484
    %v566 = vpack.c.b16 %v487, %v486
    %v567 = vpack.c.b16 %v489, %v488
    %v568 = vpack.c.b16 %v491, %v490
    %v569 = vpack.c.b16 %v493, %v492
    %v570 = vpack.c.b16 %v495, %v494
    %v571 = vpack.c.b16 %v497, %v496
    %v572 = vpack.c.b16 %v499, %v498
    %v573 = vpack.c.b16 %v501, %v500
    %v574 = vpack.c.b16 %v503, %v502
    %v575 = vpack.c.b16 %v505, %v504
    %v576 = vpack.c.b16 %v507, %v506
    %v577 = vpack.c.b16 %v509, %v508
    %v578 = vpack.c.b16 %v511, %v510
    %v579 = vpack.c.b16 %v513, %v512
    %v580 = vpack.c.b16 %v515, %v514
    %v581 = vpack.c.b16 %v517, %v516
    %646 = vmatprep.subr.bf16.mxu0 0
    %647 = vmatpush1.bf16.msra.mxu0 %v518
    %648 = vmatprep.subr.bf16.mxu0 0
    %649 = vmatpush1.bf16.msra.mxu0 %v519
    %650 = vmatprep.subr.bf16.mxu0 0
    %651 = vmatpush1.bf16.msra.mxu0 %v520
    %652 = vmatprep.subr.bf16.mxu0 0
    %653 = vmatpush1.bf16.msra.mxu0 %v521
    %654 = vmatprep.subr.bf16.mxu0 0
    %655 = vmatpush1.bf16.msra.mxu0 %v522
    %656 = vmatprep.subr.bf16.mxu0 0
    %657 = vmatpush1.bf16.msra.mxu0 %v523
    %658 = vmatprep.subr.bf16.mxu0 0
    %659 = vmatpush1.bf16.msra.mxu0 %v524
    %660 = vmatprep.subr.bf16.mxu0 0
    %661 = vmatpush1.bf16.msra.mxu0 %v525
    %662 = vmatprep.subr.bf16.mxu0 0
    %663 = vmatpush1.bf16.msra.mxu0 %v526
    %664 = vmatprep.subr.bf16.mxu0 0
    %665 = vmatpush1.bf16.msra.mxu0 %v527
    %666 = vmatprep.subr.bf16.mxu0 0
    %667 = vmatpush1.bf16.msra.mxu0 %v528
    %668 = vmatprep.subr.bf16.mxu0 0
    %669 = vmatpush1.bf16.msra.mxu0 %v529
    %670 = vmatprep.subr.bf16.mxu0 0
    %671 = vmatpush1.bf16.msra.mxu0 %v530
    %672 = vmatprep.subr.bf16.mxu0 0
    %673 = vmatpush1.bf16.msra.mxu0 %v531
    %674 = vmatprep.subr.bf16.mxu0 0
    %675 = vmatpush1.bf16.msra.mxu0 %v532
    %676 = vmatprep.subr.bf16.mxu0 0
    %677 = vmatpush1.bf16.msra.mxu0 %v533
    %678 = vmatprep.mubr.bf16.mxu0 %v249
    %679 = vmatmul.mubr.bf16.gmra.mrb[0].mxu0 %v248
    %v680 = vpop.f32.mrb[0].mxu0
    %v681 = vadd.f32 %v260, %v680
    %v682 = vpop.f32.mrb[0].mxu0
    %v683 = vpop.f32.mrb[0].mxu0
    %v684 = vpop.f32.mrb[0].mxu0
    %685 = vdwg.mxu0
    %686 = vmatprep.subr.bf16.mxu0 0
    %687 = vmatpush1.bf16.msra.mxu0 %v534
    %688 = vmatprep.subr.bf16.mxu0 0
    %689 = vmatpush1.bf16.msra.mxu0 %v535
    %690 = vmatprep.subr.bf16.mxu0 0
    %691 = vmatpush1.bf16.msra.mxu0 %v536
    %692 = vmatprep.subr.bf16.mxu0 0
    %693 = vmatpush1.bf16.msra.mxu0 %v537
    %694 = vmatprep.subr.bf16.mxu0 0
    %695 = vmatpush1.bf16.msra.mxu0 %v538
    %696 = vmatprep.subr.bf16.mxu0 0
    %697 = vmatpush1.bf16.msra.mxu0 %v539
    %698 = vmatprep.subr.bf16.mxu0 0
    %699 = vmatpush1.bf16.msra.mxu0 %v540
    %700 = vmatprep.subr.bf16.mxu0 0
    %701 = vmatpush1.bf16.msra.mxu0 %v541
    %702 = vmatprep.subr.bf16.mxu0 0
    %703 = vmatpush1.bf16.msra.mxu0 %v542
    %704 = vmatprep.subr.bf16.mxu0 0
    %705 = vmatpush1.bf16.msra.mxu0 %v543
    %706 = vmatprep.subr.bf16.mxu0 0
    %707 = vmatpush1.bf16.msra.mxu0 %v544
    %708 = vmatprep.subr.bf16.mxu0 0
    %709 = vmatpush1.bf16.msra.mxu0 %v545
    %710 = vmatprep.subr.bf16.mxu0 0
    %711 = vmatpush1.bf16.msra.mxu0 %v546
    %712 = vmatprep.subr.bf16.mxu0 0
    %713 = vmatpush1.bf16.msra.mxu0 %v547
    %714 = vmatprep.subr.bf16.mxu0 0
    %715 = vmatpush1.bf16.msra.mxu0 %v548
    %716 = vmatprep.subr.bf16.mxu0 0
    %717 = vmatpush1.bf16.msra.mxu0 %v549
    %718 = vmatprep.mubr.bf16.mxu0 %v251
    %719 = vmatmul.mubr.bf16.gmra.mrb[0].mxu0 %v250
    %v720 = vpop.f32.mrb[0].mxu0
    %v721 = vadd.f32 %v681, %v720
    %v722 = vpop.f32.mrb[0].mxu0
    %v723 = vpop.f32.mrb[0].mxu0
    %v724 = vpop.f32.mrb[0].mxu0
    %725 = vdwg.mxu0
    %726 = vmatprep.subr.bf16.mxu0 0
    %727 = vmatpush1.bf16.msra.mxu0 %v550
    %728 = vmatprep.subr.bf16.mxu0 0
    %729 = vmatpush1.bf16.msra.mxu0 %v551
    %730 = vmatprep.subr.bf16.mxu0 0
    %731 = vmatpush1.bf16.msra.mxu0 %v552
    %732 = vmatprep.subr.bf16.mxu0 0
    %733 = vmatpush1.bf16.msra.mxu0 %v553
    %734 = vmatprep.subr.bf16.mxu0 0
    %735 = vmatpush1.bf16.msra.mxu0 %v554
    %736 = vmatprep.subr.bf16.mxu0 0
    %737 = vmatpush1.bf16.msra.mxu0 %v555
    %738 = vmatprep.subr.bf16.mxu0 0
    %739 = vmatpush1.bf16.msra.mxu0 %v556
    %740 = vmatprep.subr.bf16.mxu0 0
    %741 = vmatpush1.bf16.msra.mxu0 %v557
    %742 = vmatprep.subr.bf16.mxu0 0
    %743 = vmatpush1.bf16.msra.mxu0 %v558
    %744 = vmatprep.subr.bf16.mxu0 0
    %745 = vmatpush1.bf16.msra.mxu0 %v559
    %746 = vmatprep.subr.bf16.mxu0 0
    %747 = vmatpush1.bf16.msra.mxu0 %v560
    %748 = vmatprep.subr.bf16.mxu0 0
    %749 = vmatpush1.bf16.msra.mxu0 %v561
    %750 = vmatprep.subr.bf16.mxu0 0
    %751 = vmatpush1.bf16.msra.mxu0 %v562
    %752 = vmatprep.subr.bf16.mxu0 0
    %753 = vmatpush1.bf16.msra.mxu0 %v563
    %754 = vmatprep.subr.bf16.mxu0 0
    %755 = vmatpush1.bf16.msra.mxu0 %v564
    %756 = vmatprep.subr.bf16.mxu0 0
    %757 = vmatpush1.bf16.msra.mxu0 %v565
    %758 = vmatprep.mubr.bf16.mxu0 %v253
    %759 = vmatmul.mubr.bf16.gmra.mrb[0].mxu0 %v252
    %v760 = vpop.f32.mrb[0].mxu0
    %v761 = vadd.f32 %v721, %v760
    %v762 = vpop.f32.mrb[0].mxu0
    %v763 = vpop.f32.mrb[0].mxu0
    %v764 = vpop.f32.mrb[0].mxu0
    %765 = vdwg.mxu0
    %766 = vmatprep.subr.bf16.mxu0 0
    %767 = vmatpush1.bf16.msra.mxu0 %v566
    %768 = vmatprep.subr.bf16.mxu0 0
    %769 = vmatpush1.bf16.msra.mxu0 %v567
    %770 = vmatprep.subr.bf16.mxu0 0
    %771 = vmatpush1.bf16.msra.mxu0 %v568
    %772 = vmatprep.subr.bf16.mxu0 0
    %773 = vmatpush1.bf16.msra.mxu0 %v569
    %774 = vmatprep.subr.bf16.mxu0 0
    %775 = vmatpush1.bf16.msra.mxu0 %v570
    %776 = vmatprep.subr.bf16.mxu0 0
    %777 = vmatpush1.bf16.msra.mxu0 %v571
    %778 = vmatprep.subr.bf16.mxu0 0
    %779 = vmatpush1.bf16.msra.mxu0 %v572
    %780 = vmatprep.subr.bf16.mxu0 0
    %781 = vmatpush1.bf16.msra.mxu0 %v573
    %782 = vmatprep.subr.bf16.mxu0 0
    %783 = vmatpush1.bf16.msra.mxu0 %v574
    %784 = vmatprep.subr.bf16.mxu0 0
    %785 = vmatpush1.bf16.msra.mxu0 %v575
    %786 = vmatprep.subr.bf16.mxu0 0
    %787 = vmatpush1.bf16.msra.mxu0 %v576
    %788 = vmatprep.subr.bf16.mxu0 0
    %789 = vmatpush1.bf16.msra.mxu0 %v577
    %790 = vmatprep.subr.bf16.mxu0 0
    %791 = vmatpush1.bf16.msra.mxu0 %v578
    %792 = vmatprep.subr.bf16.mxu0 0
    %793 = vmatpush1.bf16.msra.mxu0 %v579
    %794 = vmatprep.subr.bf16.mxu0 0
    %795 = vmatpush1.bf16.msra.mxu0 %v580
    %796 = vmatprep.subr.bf16.mxu0 0
    %797 = vmatpush1.bf16.msra.mxu0 %v581
    %798 = vmatprep.mubr.bf16.mxu0 %v255
    %799 = vmatmul.mubr.bf16.gmra.mrb[0].mxu0 %v254
    %v800 = vpop.f32.mrb[0].mxu0
    %v801 = vadd.f32 %v761, %v800
    %v802 = vpop.f32.mrb[0].mxu0
    %v803 = vpop.f32.mrb[0].mxu0
    %v804 = vpop.f32.mrb[0].mxu0
    %805 = vdwg.mxu0
    %v806 = vmax.f32 %v801, 0.0
    %v807 = vpack.c.bf16 %v806, %v806
    %v809 = vlaneseq
    %v810 = vshrl.u32 %v809, 7
    %v811 = vsub.s32 0, %v810
    %v812 = vrot.slane %v239, %v811
    %v830 = vunpack.c.l.b16 %v223
    %v831 = vunpack.c.l.b16 %v224
    %v832 = vunpack.c.l.b16 %v225
    %v833 = vunpack.c.l.b16 %v226
    %v834 = vunpack.c.l.b16 %v227
    %v835 = vunpack.c.l.b16 %v228
    %v836 = vunpack.c.l.b16 %v229
    %v837 = vunpack.c.l.b16 %v230
    %v838 = vunpack.c.l.b16 %v231
    %v839 = vunpack.c.l.b16 %v232
    %v840 = vunpack.c.l.b16 %v233
    %v841 = vunpack.c.l.b16 %v234
    %v842 = vunpack.c.l.b16 %v235
    %v843 = vunpack.c.l.b16 %v236
    %v844 = vunpack.c.l.b16 %v237
    %v845 = vunpack.c.l.b16 %v238
    %v846 = vpack.c.b16 %v831, %v830
    %v847 = vpack.c.b16 %v833, %v832
    %v848 = vpack.c.b16 %v835, %v834
    %v849 = vpack.c.b16 %v837, %v836
    %v850 = vpack.c.b16 %v839, %v838
    %v851 = vpack.c.b16 %v841, %v840
    %v852 = vpack.c.b16 %v843, %v842
    %v853 = vpack.c.b16 %v845, %v844
    %862 = vmatprep.subr.bf16.mxu0 0
    %863 = vmatpush1.bf16.msra.mxu0 %v846
    %864 = vmatprep.subr.bf16.mxu0 0
    %865 = vmatpush1.bf16.msra.mxu0 %v847
    %866 = vmatprep.subr.bf16.mxu0 0
    %867 = vmatpush1.bf16.msra.mxu0 %v848
    %868 = vmatprep.subr.bf16.mxu0 0
    %869 = vmatpush1.bf16.msra.mxu0 %v849
    %870 = vmatprep.subr.bf16.mxu0 0
    %871 = vmatpush1.bf16.msra.mxu0 %v850
    %872 = vmatprep.subr.bf16.mxu0 0
    %873 = vmatpush1.bf16.msra.mxu0 %v851
    %874 = vmatprep.subr.bf16.mxu0 0
    %875 = vmatpush1.bf16.msra.mxu0 %v852
    %876 = vmatprep.subr.bf16.mxu0 0
    %877 = vmatpush1.bf16.msra.mxu0 %v853
    %878 = vmatprep.subr.bf16.mxu0 0
    %879 = vmatpush1.bf16.msra.mxu0 0
    %880 = vmatprep.subr.bf16.mxu0 0
    %881 = vmatpush1.bf16.msra.mxu0 0
    %882 = vmatprep.subr.bf16.mxu0 0
    %883 = vmatpush1.bf16.msra.mxu0 0
    %884 = vmatprep.subr.bf16.mxu0 0
    %885 = vmatpush1.bf16.msra.mxu0 0
    %886 = vmatprep.subr.bf16.mxu0 0
    %887 = vmatpush1.bf16.msra.mxu0 0
    %888 = vmatprep.subr.bf16.mxu0 0
    %889 = vmatpush1.bf16.msra.mxu0 0
    %890 = vmatprep.subr.bf16.mxu0 0
    %891 = vmatpush1.bf16.msra.mxu0 0
    %892 = vmatprep.subr.bf16.mxu0 0
    %893 = vmatpush1.bf16.msra.mxu0 0
    %894 = vmatprep.mubr.bf16.mxu0 0
    %895 = vmatmul.mubr.bf16.gmra.mrb[0].mxu0 %v807
    %v896 = vpop.f32.mrb[0].mxu0
    %v897 = vadd.f32 %v812, %v896
    %v898 = vpop.f32.mrb[0].mxu0
    %v899 = vpop.f32.mrb[0].mxu0
    %v900 = vpop.f32.mrb[0].mxu0
    %901 = vdwg.mxu0
    %902 = vst [vmem:[#allocation11] sm:$0xff] %v897
    %v903 = vld [vmem:[#allocation5] sm:$0xff]
    %v904 = vld [vmem:[#allocation5 + $0x8] sm:$0xff]
    %v905 = vld [vmem:[#allocation5 + $0x10] sm:$0xff]
    %v906 = vld [vmem:[#allocation5 + $0x18] sm:$0xff]
    %v907 = vld [vmem:[#allocation5 + $0x20] sm:$0xff]
    %v908 = vld [vmem:[#allocation5 + $0x28] sm:$0xff]
    %v909 = vld [vmem:[#allocation5 + $0x30] sm:$0xff]
    %v910 = vld [vmem:[#allocation5 + $0x38] sm:$0xff]
    %v911 = vpack.c.bf16 %v903, %v903
    %v912 = vpack.c.bf16 %v904, %v904
    %v913 = vpack.c.bf16 %v905, %v905
    %v914 = vpack.c.bf16 %v906, %v906
    %v915 = vpack.c.bf16 %v907, %v907
    %v916 = vpack.c.bf16 %v908, %v908
    %v917 = vpack.c.bf16 %v909, %v909
    %v918 = vpack.c.bf16 %v910, %v910
    %919 = vmatprep.subr.bf16.mxu0 0
    %920 = vmatpush1.bf16.msra.mxu0 %v518
    %921 = vmatprep.subr.bf16.mxu0 0
    %922 = vmatpush1.bf16.msra.mxu0 %v519
    %923 = vmatprep.subr.bf16.mxu0 0
    %924 = vmatpush1.bf16.msra.mxu0 %v520
    %925 = vmatprep.subr.bf16.mxu0 0
    %926 = vmatpush1.bf16.msra.mxu0 %v521
    %927 = vmatprep.subr.bf16.mxu0 0
    %928 = vmatpush1.bf16.msra.mxu0 %v522
    %929 = vmatprep.subr.bf16.mxu0 0
    %930 = vmatpush1.bf16.msra.mxu0 %v523
    %931 = vmatprep.subr.bf16.mxu0 0
    %932 = vmatpush1.bf16.msra.mxu0 %v524
    %933 = vmatprep.subr.bf16.mxu0 0
    %934 = vmatpush1.bf16.msra.mxu0 %v525
    %935 = vmatprep.subr.bf16.mxu0 0
    %936 = vmatpush1.bf16.msra.mxu0 %v526
    %937 = vmatprep.subr.bf16.mxu0 0
    %938 = vmatpush1.bf16.msra.mxu0 %v527
    %939 = vmatprep.subr.bf16.mxu0 0
    %940 = vmatpush1.bf16.msra.mxu0 %v528
    %941 = vmatprep.subr.bf16.mxu0 0
    %942 = vmatpush1.bf16.msra.mxu0 %v529
    %943 = vmatprep.subr.bf16.mxu0 0
    %944 = vmatpush1.bf16.msra.mxu0 %v530
    %945 = vmatprep.subr.bf16.mxu0 0
    %946 = vmatpush1.bf16.msra.mxu0 %v531
    %947 = vmatprep.subr.bf16.mxu0 0
    %948 = vmatpush1.bf16.msra.mxu0 %v532
    %949 = vmatprep.subr.bf16.mxu0 0
    %950 = vmatpush1.bf16.msra.mxu0 %v533
    %951 = vmatprep.mubr.bf16.mxu0 %v912
    %952 = vmatmul.mubr.bf16.gmra.mrb[0].mxu0 %v911
    %v953 = vpop.f32.mrb[0].mxu0
    %v954 = vadd.f32 %v260, %v953
    %v955 = vpop.f32.mrb[0].mxu0
    %v956 = vpop.f32.mrb[0].mxu0
    %v957 = vpop.f32.mrb[0].mxu0
    %958 = vdwg.mxu0
    %959 = vmatprep.subr.bf16.mxu0 0
    %960 = vmatpush1.bf16.msra.mxu0 %v534
    %961 = vmatprep.subr.bf16.mxu0 0
    %962 = vmatpush1.bf16.msra.mxu0 %v535
    %963 = vmatprep.subr.bf16.mxu0 0
    %964 = vmatpush1.bf16.msra.mxu0 %v536
    %965 = vmatprep.subr.bf16.mxu0 0
    %966 = vmatpush1.bf16.msra.mxu0 %v537
    %967 = vmatprep.subr.bf16.mxu0 0
    %968 = vmatpush1.bf16.msra.mxu0 %v538
    %969 = vmatprep.subr.bf16.mxu0 0
    %970 = vmatpush1.bf16.msra.mxu0 %v539
    %971 = vmatprep.subr.bf16.mxu0 0
    %972 = vmatpush1.bf16.msra.mxu0 %v540
    %973 = vmatprep.subr.bf16.mxu0 0
    %974 = vmatpush1.bf16.msra.mxu0 %v541
    %975 = vmatprep.subr.bf16.mxu0 0
    %976 = vmatpush1.bf16.msra.mxu0 %v542
    %977 = vmatprep.subr.bf16.mxu0 0
    %978 = vmatpush1.bf16.msra.mxu0 %v543
    %979 = vmatprep.subr.bf16.mxu0 0
    %980 = vmatpush1.bf16.msra.mxu0 %v544
    %981 = vmatprep.subr.bf16.mxu0 0
    %982 = vmatpush1.bf16.msra.mxu0 %v545
    %983 = vmatprep.subr.bf16.mxu0 0
    %984 = vmatpush1.bf16.msra.mxu0 %v546
    %985 = vmatprep.subr.bf16.mxu0 0
    %986 = vmatpush1.bf16.msra.mxu0 %v547
    %987 = vmatprep.subr.bf16.mxu0 0
    %988 = vmatpush1.bf16.msra.mxu0 %v548
    %989 = vmatprep.subr.bf16.mxu0 0
    %990 = vmatpush1.bf16.msra.mxu0 %v549
    %991 = vmatprep.mubr.bf16.mxu0 %v914
    %992 = vmatmul.mubr.bf16.gmra.mrb[0].mxu0 %v913
    %v993 = vpop.f32.mrb[0].mxu0
    %v994 = vadd.f32 %v954, %v993
    %v995 = vpop.f32.mrb[0].mxu0
    %v996 = vpop.f32.mrb[0].mxu0
    %v997 = vpop.f32.mrb[0].mxu0
    %998 = vdwg.mxu0
    %999 = vmatprep.subr.bf16.mxu0 0
    %1000 = vmatpush1.bf16.msra.mxu0 %v550
    %1001 = vmatprep.subr.bf16.mxu0 0
    %1002 = vmatpush1.bf16.msra.mxu0 %v551
    %1003 = vmatprep.subr.bf16.mxu0 0
    %1004 = vmatpush1.bf16.msra.mxu0 %v552
    %1005 = vmatprep.subr.bf16.mxu0 0
    %1006 = vmatpush1.bf16.msra.mxu0 %v553
    %1007 = vmatprep.subr.bf16.mxu0 0
    %1008 = vmatpush1.bf16.msra.mxu0 %v554
    %1009 = vmatprep.subr.bf16.mxu0 0
    %1010 = vmatpush1.bf16.msra.mxu0 %v555
    %1011 = vmatprep.subr.bf16.mxu0 0
    %1012 = vmatpush1.bf16.msra.mxu0 %v556
    %1013 = vmatprep.subr.bf16.mxu0 0
    %1014 = vmatpush1.bf16.msra.mxu0 %v557
    %1015 = vmatprep.subr.bf16.mxu0 0
    %1016 = vmatpush1.bf16.msra.mxu0 %v558
    %1017 = vmatprep.subr.bf16.mxu0 0
    %1018 = vmatpush1.bf16.msra.mxu0 %v559
    %1019 = vmatprep.subr.bf16.mxu0 0
    %1020 = vmatpush1.bf16.msra.mxu0 %v560
    %1021 = vmatprep.subr.bf16.mxu0 0
    %1022 = vmatpush1.bf16.msra.mxu0 %v561
    %1023 = vmatprep.subr.bf16.mxu0 0
    %1024 = vmatpush1.bf16.msra.mxu0 %v562
    %1025 = vmatprep.subr.bf16.mxu0 0
    %1026 = vmatpush1.bf16.msra.mxu0 %v563
    %1027 = vmatprep.subr.bf16.mxu0 0
    %1028 = vmatpush1.bf16.msra.mxu0 %v564
    %1029 = vmatprep.subr.bf16.mxu0 0
    %1030 = vmatpush1.bf16.msra.mxu0 %v565
    %1031 = vmatprep.mubr.bf16.mxu0 %v916
    %1032 = vmatmul.mubr.bf16.gmra.mrb[0].mxu0 %v915
    %v1033 = vpop.f32.mrb[0].mxu0
    %v1034 = vadd.f32 %v994, %v1033
    %v1035 = vpop.f32.mrb[0].mxu0
    %v1036 = vpop.f32.mrb[0].mxu0
    %v1037 = vpop.f32.mrb[0].mxu0
    %1038 = vdwg.mxu0
    %1039 = vmatprep.subr.bf16.mxu0 0
    %1040 = vmatpush1.bf16.msra.mxu0 %v566
    %1041 = vmatprep.subr.bf16.mxu0 0
    %1042 = vmatpush1.bf16.msra.mxu0 %v567
    %1043 = vmatprep.subr.bf16.mxu0 0
    %1044 = vmatpush1.bf16.msra.mxu0 %v568
    %1045 = vmatprep.subr.bf16.mxu0 0
    %1046 = vmatpush1.bf16.msra.mxu0 %v569
    %1047 = vmatprep.subr.bf16.mxu0 0
    %1048 = vmatpush1.bf16.msra.mxu0 %v570
    %1049 = vmatprep.subr.bf16.mxu0 0
    %1050 = vmatpush1.bf16.msra.mxu0 %v571
    %1051 = vmatprep.subr.bf16.mxu0 0
    %1052 = vmatpush1.bf16.msra.mxu0 %v572
    %1053 = vmatprep.subr.bf16.mxu0 0
    %1054 = vmatpush1.bf16.msra.mxu0 %v573
    %1055 = vmatprep.subr.bf16.mxu0 0
    %1056 = vmatpush1.bf16.msra.mxu0 %v574
    %1057 = vmatprep.subr.bf16.mxu0 0
    %1058 = vmatpush1.bf16.msra.mxu0 %v575
    %1059 = vmatprep.subr.bf16.mxu0 0
    %1060 = vmatpush1.bf16.msra.mxu0 %v576
    %1061 = vmatprep.subr.bf16.mxu0 0
    %1062 = vmatpush1.bf16.msra.mxu0 %v577
    %1063 = vmatprep.subr.bf16.mxu0 0
    %1064 = vmatpush1.bf16.msra.mxu0 %v578
    %1065 = vmatprep.subr.bf16.mxu0 0
    %1066 = vmatpush1.bf16.msra.mxu0 %v579
    %1067 = vmatprep.subr.bf16.mxu0 0
    %1068 = vmatpush1.bf16.msra.mxu0 %v580
    %1069 = vmatprep.subr.bf16.mxu0 0
    %1070 = vmatpush1.bf16.msra.mxu0 %v581
    %1071 = vmatprep.mubr.bf16.mxu0 %v918
    %1072 = vmatmul.mubr.bf16.gmra.mrb[0].mxu0 %v917
    %v1073 = vpop.f32.mrb[0].mxu0
    %v1074 = vadd.f32 %v1034, %v1073
    %v1075 = vpop.f32.mrb[0].mxu0
    %v1076 = vpop.f32.mrb[0].mxu0
    %v1077 = vpop.f32.mrb[0].mxu0
    %1078 = vdwg.mxu0
    %v1079 = vmax.f32 %v1074, 0.0
    %v1080 = vpack.c.bf16 %v1079, %v1079
    %1081 = vmatprep.subr.bf16.mxu0 0
    %1082 = vmatpush1.bf16.msra.mxu0 %v846
    %1083 = vmatprep.subr.bf16.mxu0 0
    %1084 = vmatpush1.bf16.msra.mxu0 %v847
    %1085 = vmatprep.subr.bf16.mxu0 0
    %1086 = vmatpush1.bf16.msra.mxu0 %v848
    %1087 = vmatprep.subr.bf16.mxu0 0
    %1088 = vmatpush1.bf16.msra.mxu0 %v849
    %1089 = vmatprep.subr.bf16.mxu0 0
    %1090 = vmatpush1.bf16.msra.mxu0 %v850
    %1091 = vmatprep.subr.bf16.mxu0 0
    %1092 = vmatpush1.bf16.msra.mxu0 %v851
    %1093 = vmatprep.subr.bf16.mxu0 0
    %1094 = vmatpush1.bf16.msra.mxu0 %v852
    %1095 = vmatprep.subr.bf16.mxu0 0
    %1096 = vmatpush1.bf16.msra.mxu0 %v853
    %1097 = vmatprep.subr.bf16.mxu0 0
    %1098 = vmatpush1.bf16.msra.mxu0 0
    %1099 = vmatprep.subr.bf16.mxu0 0
    %1100 = vmatpush1.bf16.msra.mxu0 0
    %1101 = vmatprep.subr.bf16.mxu0 0
    %1102 = vmatpush1.bf16.msra.mxu0 0
    %1103 = vmatprep.subr.bf16.mxu0 0
    %1104 = vmatpush1.bf16.msra.mxu0 0
    %1105 = vmatprep.subr.bf16.mxu0 0
    %1106 = vmatpush1.bf16.msra.mxu0 0
    %1107 = vmatprep.subr.bf16.mxu0 0
    %1108 = vmatpush1.bf16.msra.mxu0 0
    %1109 = vmatprep.subr.bf16.mxu0 0
    %1110 = vmatpush1.bf16.msra.mxu0 0
    %1111 = vmatprep.subr.bf16.mxu0 0
    %1112 = vmatpush1.bf16.msra.mxu0 0
    %1113 = vmatprep.mubr.bf16.mxu0 0
    %1114 = vmatmul.mubr.bf16.gmra.mrb[0].mxu0 %v1080
    %v1115 = vpop.f32.mrb[0].mxu0
    %v1116 = vadd.f32 %v812, %v1115
    %v1117 = vpop.f32.mrb[0].mxu0
    %v1118 = vpop.f32.mrb[0].mxu0
    %v1119 = vpop.f32.mrb[0].mxu0
    %1120 = vdwg.mxu0
    %1121 = vst [vmem:[#allocation12] sm:$0xff] %v1116
    %v1122 = vld [vmem:[#allocation7] sm:$0xff]
    %v1123 = vld [vmem:[#allocation7 + $0x8] sm:$0xff]
    %v1124 = vld [vmem:[#allocation7 + $0x10] sm:$0xff]
    %v1125 = vld [vmem:[#allocation7 + $0x18] sm:$0xff]
    %v1126 = vld [vmem:[#allocation7 + $0x20] sm:$0xff]
    %v1127 = vld [vmem:[#allocation7 + $0x28] sm:$0xff]
    %v1128 = vld [vmem:[#allocation7 + $0x30] sm:$0xff]
    %v1129 = vld [vmem:[#allocation7 + $0x38] sm:$0xff]
    %v1130 = vpack.c.bf16 %v1122, %v1122
    %v1131 = vpack.c.bf16 %v1123, %v1123
    %v1132 = vpack.c.bf16 %v1124, %v1124
    %v1133 = vpack.c.bf16 %v1125, %v1125
    %v1134 = vpack.c.bf16 %v1126, %v1126
    %v1135 = vpack.c.bf16 %v1127, %v1127
    %v1136 = vpack.c.bf16 %v1128, %v1128
    %v1137 = vpack.c.bf16 %v1129, %v1129
    %1138 = vmatprep.subr.bf16.mxu0 0
    %1139 = vmatpush1.bf16.msra.mxu0 %v518
    %1140 = vmatprep.subr.bf16.mxu0 0
    %1141 = vmatpush1.bf16.msra.mxu0 %v519
    %1142 = vmatprep.subr.bf16.mxu0 0
    %1143 = vmatpush1.bf16.msra.mxu0 %v520
    %1144 = vmatprep.subr.bf16.mxu0 0
    %1145 = vmatpush1.bf16.msra.mxu0 %v521
    %1146 = vmatprep.subr.bf16.mxu0 0
    %1147 = vmatpush1.bf16.msra.mxu0 %v522
    %1148 = vmatprep.subr.bf16.mxu0 0
    %1149 = vmatpush1.bf16.msra.mxu0 %v523
    %1150 = vmatprep.subr.bf16.mxu0 0
    %1151 = vmatpush1.bf16.msra.mxu0 %v524
    %1152 = vmatprep.subr.bf16.mxu0 0
    %1153 = vmatpush1.bf16.msra.mxu0 %v525
    %1154 = vmatprep.subr.bf16.mxu0 0
    %1155 = vmatpush1.bf16.msra.mxu0 %v526
    %1156 = vmatprep.subr.bf16.mxu0 0
    %1157 = vmatpush1.bf16.msra.mxu0 %v527
    %1158 = vmatprep.subr.bf16.mxu0 0
    %1159 = vmatpush1.bf16.msra.mxu0 %v528
    %1160 = vmatprep.subr.bf16.mxu0 0
    %1161 = vmatpush1.bf16.msra.mxu0 %v529
    %1162 = vmatprep.subr.bf16.mxu0 0
    %1163 = vmatpush1.bf16.msra.mxu0 %v530
    %1164 = vmatprep.subr.bf16.mxu0 0
    %1165 = vmatpush1.bf16.msra.mxu0 %v531
    %1166 = vmatprep.subr.bf16.mxu0 0
    %1167 = vmatpush1.bf16.msra.mxu0 %v532
    %1168 = vmatprep.subr.bf16.mxu0 0
    %1169 = vmatpush1.bf16.msra.mxu0 %v533
    %1170 = vmatprep.mubr.bf16.mxu0 %v1131
    %1171 = vmatmul.mubr.bf16.gmra.mrb[0].mxu0 %v1130
    %v1172 = vpop.f32.mrb[0].mxu0
    %v1173 = vadd.f32 %v260, %v1172
    %v1174 = vpop.f32.mrb[0].mxu0
    %v1175 = vpop.f32.mrb[0].mxu0
    %v1176 = vpop.f32.mrb[0].mxu0
    %1177 = vdwg.mxu0
    %1178 = vmatprep.subr.bf16.mxu0 0
    %1179 = vmatpush1.bf16.msra.mxu0 %v534
    %1180 = vmatprep.subr.bf16.mxu0 0
    %1181 = vmatpush1.bf16.msra.mxu0 %v535
    %1182 = vmatprep.subr.bf16.mxu0 0
    %1183 = vmatpush1.bf16.msra.mxu0 %v536
    %1184 = vmatprep.subr.bf16.mxu0 0
    %1185 = vmatpush1.bf16.msra.mxu0 %v537
    %1186 = vmatprep.subr.bf16.mxu0 0
    %1187 = vmatpush1.bf16.msra.mxu0 %v538
    %1188 = vmatprep.subr.bf16.mxu0 0
    %1189 = vmatpush1.bf16.msra.mxu0 %v539
    %1190 = vmatprep.subr.bf16.mxu0 0
    %1191 = vmatpush1.bf16.msra.mxu0 %v540
    %1192 = vmatprep.subr.bf16.mxu0 0
    %1193 = vmatpush1.bf16.msra.mxu0 %v541
    %1194 = vmatprep.subr.bf16.mxu0 0
    %1195 = vmatpush1.bf16.msra.mxu0 %v542
    %1196 = vmatprep.subr.bf16.mxu0 0
    %1197 = vmatpush1.bf16.msra.mxu0 %v543
    %1198 = vmatprep.subr.bf16.mxu0 0
    %1199 = vmatpush1.bf16.msra.mxu0 %v544
    %1200 = vmatprep.subr.bf16.mxu0 0
    %1201 = vmatpush1.bf16.msra.mxu0 %v545
    %1202 = vmatprep.subr.bf16.mxu0 0
    %1203 = vmatpush1.bf16.msra.mxu0 %v546
    %1204 = vmatprep.subr.bf16.mxu0 0
    %1205 = vmatpush1.bf16.msra.mxu0 %v547
    %1206 = vmatprep.subr.bf16.mxu0 0
    %1207 = vmatpush1.bf16.msra.mxu0 %v548
    %1208 = vmatprep.subr.bf16.mxu0 0
    %1209 = vmatpush1.bf16.msra.mxu0 %v549
    %1210 = vmatprep.mubr.bf16.mxu0 %v1133
    %1211 = vmatmul.mubr.bf16.gmra.mrb[0].mxu0 %v1132
    %v1212 = vpop.f32.mrb[0].mxu0
    %v1213 = vadd.f32 %v1173, %v1212
    %v1214 = vpop.f32.mrb[0].mxu0
    %v1215 = vpop.f32.mrb[0].mxu0
    %v1216 = vpop.f32.mrb[0].mxu0
    %1217 = vdwg.mxu0
    %1218 = vmatprep.subr.bf16.mxu0 0
    %1219 = vmatpush1.bf16.msra.mxu0 %v550
    %1220 = vmatprep.subr.bf16.mxu0 0
    %1221 = vmatpush1.bf16.msra.mxu0 %v551
    %1222 = vmatprep.subr.bf16.mxu0 0
    %1223 = vmatpush1.bf16.msra.mxu0 %v552
    %1224 = vmatprep.subr.bf16.mxu0 0
    %1225 = vmatpush1.bf16.msra.mxu0 %v553
    %1226 = vmatprep.subr.bf16.mxu0 0
    %1227 = vmatpush1.bf16.msra.mxu0 %v554
    %1228 = vmatprep.subr.bf16.mxu0 0
    %1229 = vmatpush1.bf16.msra.mxu0 %v555
    %1230 = vmatprep.subr.bf16.mxu0 0
    %1231 = vmatpush1.bf16.msra.mxu0 %v556
    %1232 = vmatprep.subr.bf16.mxu0 0
    %1233 = vmatpush1.bf16.msra.mxu0 %v557
    %1234 = vmatprep.subr.bf16.mxu0 0
    %1235 = vmatpush1.bf16.msra.mxu0 %v558
    %1236 = vmatprep.subr.bf16.mxu0 0
    %1237 = vmatpush1.bf16.msra.mxu0 %v559
    %1238 = vmatprep.subr.bf16.mxu0 0
    %1239 = vmatpush1.bf16.msra.mxu0 %v560
    %1240 = vmatprep.subr.bf16.mxu0 0
    %1241 = vmatpush1.bf16.msra.mxu0 %v561
    %1242 = vmatprep.subr.bf16.mxu0 0
    %1243 = vmatpush1.bf16.msra.mxu0 %v562
    %1244 = vmatprep.subr.bf16.mxu0 0
    %1245 = vmatpush1.bf16.msra.mxu0 %v563
    %1246 = vmatprep.subr.bf16.mxu0 0
    %1247 = vmatpush1.bf16.msra.mxu0 %v564
    %1248 = vmatprep.subr.bf16.mxu0 0
    %1249 = vmatpush1.bf16.msra.mxu0 %v565
    %1250 = vmatprep.mubr.bf16.mxu0 %v1135
    %1251 = vmatmul.mubr.bf16.gmra.mrb[0].mxu0 %v1134
    %v1252 = vpop.f32.mrb[0].mxu0
    %v1253 = vadd.f32 %v1213, %v1252
    %v1254 = vpop.f32.mrb[0].mxu0
    %v1255 = vpop.f32.mrb[0].mxu0
    %v1256 = vpop.f32.mrb[0].mxu0
    %1257 = vdwg.mxu0
    %1258 = vmatprep.subr.bf16.mxu0 0
    %1259 = vmatpush1.bf16.msra.mxu0 %v566
    %1260 = vmatprep.subr.bf16.mxu0 0
    %1261 = vmatpush1.bf16.msra.mxu0 %v567
    %1262 = vmatprep.subr.bf16.mxu0 0
    %1263 = vmatpush1.bf16.msra.mxu0 %v568
    %1264 = vmatprep.subr.bf16.mxu0 0
    %1265 = vmatpush1.bf16.msra.mxu0 %v569
    %1266 = vmatprep.subr.bf16.mxu0 0
    %1267 = vmatpush1.bf16.msra.mxu0 %v570
    %1268 = vmatprep.subr.bf16.mxu0 0
    %1269 = vmatpush1.bf16.msra.mxu0 %v571
    %1270 = vmatprep.subr.bf16.mxu0 0
    %1271 = vmatpush1.bf16.msra.mxu0 %v572
    %1272 = vmatprep.subr.bf16.mxu0 0
    %1273 = vmatpush1.bf16.msra.mxu0 %v573
    %1274 = vmatprep.subr.bf16.mxu0 0
    %1275 = vmatpush1.bf16.msra.mxu0 %v574
    %1276 = vmatprep.subr.bf16.mxu0 0
    %1277 = vmatpush1.bf16.msra.mxu0 %v575
    %1278 = vmatprep.subr.bf16.mxu0 0
    %1279 = vmatpush1.bf16.msra.mxu0 %v576
    %1280 = vmatprep.subr.bf16.mxu0 0
    %1281 = vmatpush1.bf16.msra.mxu0 %v577
    %1282 = vmatprep.subr.bf16.mxu0 0
    %1283 = vmatpush1.bf16.msra.mxu0 %v578
    %1284 = vmatprep.subr.bf16.mxu0 0
    %1285 = vmatpush1.bf16.msra.mxu0 %v579
    %1286 = vmatprep.subr.bf16.mxu0 0
    %1287 = vmatpush1.bf16.msra.mxu0 %v580
    %1288 = vmatprep.subr.bf16.mxu0 0
    %1289 = vmatpush1.bf16.msra.mxu0 %v581
    %1290 = vmatprep.mubr.bf16.mxu0 %v1137
    %1291 = vmatmul.mubr.bf16.gmra.mrb[0].mxu0 %v1136
    %v1292 = vpop.f32.mrb[0].mxu0
    %v1293 = vadd.f32 %v1253, %v1292
    %v1294 = vpop.f32.mrb[0].mxu0
    %v1295 = vpop.f32.mrb[0].mxu0
    %v1296 = vpop.f32.mrb[0].mxu0
    %1297 = vdwg.mxu0
    %v1298 = vmax.f32 %v1293, 0.0
    %v1299 = vpack.c.bf16 %v1298, %v1298
    %1300 = vmatprep.subr.bf16.mxu0 0
    %1301 = vmatpush1.bf16.msra.mxu0 %v846
    %1302 = vmatprep.subr.bf16.mxu0 0
    %1303 = vmatpush1.bf16.msra.mxu0 %v847
    %1304 = vmatprep.subr.bf16.mxu0 0
    %1305 = vmatpush1.bf16.msra.mxu0 %v848
    %1306 = vmatprep.subr.bf16.mxu0 0
    %1307 = vmatpush1.bf16.msra.mxu0 %v849
    %1308 = vmatprep.subr.bf16.mxu0 0
    %1309 = vmatpush1.bf16.msra.mxu0 %v850
    %1310 = vmatprep.subr.bf16.mxu0 0
    %1311 = vmatpush1.bf16.msra.mxu0 %v851
    %1312 = vmatprep.subr.bf16.mxu0 0
    %1313 = vmatpush1.bf16.msra.mxu0 %v852
    %1314 = vmatprep.subr.bf16.mxu0 0
    %1315 = vmatpush1.bf16.msra.mxu0 %v853
    %1316 = vmatprep.subr.bf16.mxu0 0
    %1317 = vmatpush1.bf16.msra.mxu0 0
    %1318 = vmatprep.subr.bf16.mxu0 0
    %1319 = vmatpush1.bf16.msra.mxu0 0
    %1320 = vmatprep.subr.bf16.mxu0 0
    %1321 = vmatpush1.bf16.msra.mxu0 0
    %1322 = vmatprep.subr.bf16.mxu0 0
    %1323 = vmatpush1.bf16.msra.mxu0 0
    %1324 = vmatprep.subr.bf16.mxu0 0
    %1325 = vmatpush1.bf16.msra.mxu0 0
    %1326 = vmatprep.subr.bf16.mxu0 0
    %1327 = vmatpush1.bf16.msra.mxu0 0
    %1328 = vmatprep.subr.bf16.mxu0 0
    %1329 = vmatpush1.bf16.msra.mxu0 0
    %1330 = vmatprep.subr.bf16.mxu0 0
    %1331 = vmatpush1.bf16.msra.mxu0 0
    %1332 = vmatprep.mubr.bf16.mxu0 0
    %1333 = vmatmul.mubr.bf16.gmra.mrb[0].mxu0 %v1299
    %v1334 = vpop.f32.mrb[0].mxu0
    %v1335 = vadd.f32 %v812, %v1334
    %v1336 = vpop.f32.mrb[0].mxu0
    %v1337 = vpop.f32.mrb[0].mxu0
    %v1338 = vpop.f32.mrb[0].mxu0
    %1339 = vdwg.mxu0
    %1340 = vst [vmem:[#allocation14] sm:$0xff] %v1335
    // Predicated region
    $region50: #{tpu_custom_call.1} parent=1 // pred_check
      _
    $region51: #{tpu_custom_call.1} parent=1 // pred_check_branch
      %1342 = sbr.rel (0) target = $region53
    $region52: #{tpu_custom_call.1} parent=1 // pred_region
      %s1344 = ssub.s32 128, 128
      %1345 = vsyncadd [#allocation4], %s1344
      %s1347 = sshll.u32 [#allocation11], 4
      %s1348 = int_to_ptr.vmem [resolvable:$true] %s1347
      %1350 = dma.vmem_to_hbm [thread:$0]  %s1348, 128, %s7, [#allocation4]
    $region53: #{tpu_custom_call.1} parent=1 // pred_fallthru
      _
    // Predicated region
    $region54: #{tpu_custom_call.1} parent=1 // pred_check
      _
    $region55: #{tpu_custom_call.1} parent=1 // pred_check_branch
      %1352 = sbr.rel (0) target = $region57
    $region56: #{tpu_custom_call.1} parent=1 // pred_region
      %s1354 = ssub.s32 128, 128
      %1355 = vsyncadd [#allocation13], %s1354
      %s1357 = sshll.u32 [#allocation12], 4
      %s1358 = int_to_ptr.vmem [resolvable:$true] %s1357
      %1360 = dma.vmem_to_hbm [thread:$0]  %s1358, 128, %s8, [#allocation13]
    $region57: #{tpu_custom_call.1} parent=1 // pred_fallthru
      _
    // Predicated region
    $region58: #{tpu_custom_call.1} parent=1 // pred_check
      _
    $region59: #{tpu_custom_call.1} parent=1 // pred_check_branch
      %1362 = sbr.rel (0) target = $region61
    $region60: #{tpu_custom_call.1} parent=1 // pred_region
      %s1364 = ssub.s32 128, 128
      %1365 = vsyncadd [#allocation13], %s1364
      %s1367 = sshll.u32 [#allocation14], 4
      %s1368 = int_to_ptr.vmem [resolvable:$true] %s1367
      %1370 = dma.vmem_to_hbm [thread:$0]  %s1368, 128, %s9, [#allocation13]
    $region61: #{tpu_custom_call.1} parent=1 // pred_fallthru
      _
    // Predicated region
    $region62: #{tpu_custom_call.1} parent=1 // pred_check
      _
    $region63: #{tpu_custom_call.1} parent=1 // pred_check_branch
      %1372 = sbr.rel (0) target = $region65
    $region64: #{tpu_custom_call.1} parent=1 // pred_region
      %1373 = dma.done [#allocation4], 128
    $region65: #{tpu_custom_call.1} parent=1 // pred_fallthru
      _
    // Predicated region
    $region66: #{tpu_custom_call.1} parent=1 // pred_check
      _
    $region67: #{tpu_custom_call.1} parent=1 // pred_check_branch
      %1375 = sbr.rel (0) target = $region69
    $region68: #{tpu_custom_call.1} parent=1 // pred_region
      %1376 = dma.done [#allocation13], 128
    $region69: #{tpu_custom_call.1} parent=1 // pred_fallthru
      _
    // Predicated region
    $region70: #{tpu_custom_call.1} parent=1 // pred_check
      _
    $region71: #{tpu_custom_call.1} parent=1 // pred_check_branch
      %1378 = sbr.rel (0) target = $region73
    $region72: #{tpu_custom_call.1} parent=1 // pred_region
      %1379 = dma.done [#allocation13], 128
    $region73: #{tpu_custom_call.1} parent=1 // pred_fallthru
      _
    %1380 = vsyncpa [#allocation3], 1
    %1381 = vsyncpa [#allocation6], 1
    %1382 = vsyncpa [#allocation9], 1
    %1383 = vsyncpa [#allocation4], 1
    %1384 = vsyncpa [#allocation13], 1

</llo_original>
